<compile_context>
chip_gen: v7x
topology: tpu7x:2x2x1
jax: 0.10.0
libtpu: 0.0.40
codegen_flags: <defaults>
</compile_context>

<pallas_src>
import math

import jax
import jax.numpy as jnp
import numpy as np
from jax import lax
from jax.experimental import pallas as pl
from jax.experimental.pallas import tpu as pltpu

LRELU_SLOPE = 0.2
H1, H2, OUT = 512, 256, 1
_OUT_ROWS = 8          # sublane-padded transposed output rows; row 0 is the logit


def _round_up(x, m):
    return (x + m - 1) // m * m


def _leaky_relu(x):
    return jnp.where(x > 0, x, LRELU_SLOPE * x)


def discriminator_kernel(x_ref, w1_ref, b1_ref, w2_ref, b2_ref, w3t_ref, b3t_ref,
                         out_ref):
    # x_ref: (TB, D) f32; w1/w2/w3t: bf16; b1/b2/b3t: f32; out_ref: (8, TB) f32.
    x = x_ref[...].astype(jnp.bfloat16)

    h1 = jnp.dot(x, w1_ref[...], preferred_element_type=jnp.float32) + b1_ref[...]
    h1 = _leaky_relu(h1).astype(jnp.bfloat16)

    h2 = jnp.dot(h1, w2_ref[...], preferred_element_type=jnp.float32) + b2_ref[...]
    h2 = _leaky_relu(h2).astype(jnp.bfloat16)

    # Final layer computed transposed: (8, H2) . (TB, H2)^T -> (8, TB)
    # so the batch sits on the lane axis of the (tiny) output writeback.
    out = lax.dot_general(w3t_ref[...], h2, (((1,), (1,)), ((), ())),
                          preferred_element_type=jnp.float32)
    out_ref[...] = out + b3t_ref[...]


def init_params(key, img_shape):
    """PyTorch-style Linear init (U(-1/sqrt(fan_in), 1/sqrt(fan_in))), f32."""
    d_in = int(np.prod(img_shape))
    dims = [d_in, H1, H2, OUT]
    params = []
    keys = jax.random.split(key, len(dims) - 1)
    for i in range(len(dims) - 1):
        fan_in, fan_out = dims[i], dims[i + 1]
        bound = 1.0 / math.sqrt(fan_in)
        kw, kb = jax.random.split(keys[i])
        w = jax.random.uniform(kw, (fan_in, fan_out), jnp.float32, -bound, bound)
        b = jax.random.uniform(kb, (fan_out,), jnp.float32, -bound, bound)
        params.append((w, b))
    return params


def pack_params(params):
    """Cast weights to bf16; transpose + sublane-pad the final (256,1) weight."""
    (w1, b1), (w2, b2), (w3, b3) = params
    w1p = w1.astype(jnp.bfloat16)                       # (d_in, 512)
    w2p = w2.astype(jnp.bfloat16)                       # (512, 256)
    # Transposed final weight: row 0 = real weights, rows 1..7 zero padding.
    w3t = jnp.zeros((_OUT_ROWS, H2), jnp.bfloat16)
    w3t = w3t.at[0, :].set(w3[:, 0].astype(jnp.bfloat16))
    b1p = b1.reshape(1, H1).astype(jnp.float32)
    b2p = b2.reshape(1, H2).astype(jnp.float32)
    b3t = jnp.zeros((_OUT_ROWS, 1), jnp.float32).at[0, 0].set(b3[0])
    return (w1p, b1p, w2p, b2p, w3t, b3t)


def _choose_batch_tile(B):
    if B <= 128:
        # Single grid step; round to 16 rows (bf16 sublane packing).
        return _round_up(B, 16)
    if B <= 2048:
        # >= 2 lane-aligned tiles so the parallel axis shards across v7x's 2 TCs.
        return max(_round_up(pl.cdiv(B, 2), 128), 128)
    return 1024


def discriminator_forward(img, packed):
    w1p, b1p, w2p, b2p, w3t, b3t = packed
    B = img.shape[0]
    d_in = int(np.prod(img.shape[1:]))
    x = img.reshape(B, d_in)            # fed directly: no pad/cast materialization

    tb = _choose_batch_tile(B)
    steps = pl.cdiv(B, tb)
    b_pad = steps * tb                  # output is allocated padded; sliced below

    # Activation spec: last block dim == full array dim (legal even if d_in % 128
    # != 0). Deeper buffering only when there are enough grid steps to hide DMA.
    if steps >= 3:
        x_spec = pl.BlockSpec((tb, d_in), lambda i: (i, 0),
                              pipeline_mode=pl.Buffered(3))
    else:
        x_spec = pl.BlockSpec((tb, d_in), lambda i: (i, 0))

    flops = 2 * b_pad * (d_in * H1 + H1 * H2 + H2 * OUT)
    bytes_accessed = (
        x.size * x.dtype.itemsize
        + (w1p.size + w2p.size + w3t.size) * 2
        + (b1p.size + b2p.size + b3t.size) * 4
        + _OUT_ROWS * b_pad * 4
    )

    out = pl.pallas_call(
        discriminator_kernel,
        out_shape=jax.ShapeDtypeStruct((_OUT_ROWS, b_pad), jnp.float32),
        grid_spec=pltpu.PrefetchScalarGridSpec(
            num_scalar_prefetch=0,
            grid=(steps,),
            in_specs=[
                x_spec,                                            # activations
                pl.BlockSpec((d_in, H1), lambda i: (0, 0)),        # W1 (resident)
                pl.BlockSpec((1, H1), lambda i: (0, 0)),           # b1
                pl.BlockSpec((H1, H2), lambda i: (0, 0)),          # W2
                pl.BlockSpec((1, H2), lambda i: (0, 0)),           # b2
                pl.BlockSpec((_OUT_ROWS, H2), lambda i: (0, 0)),   # W3^T (padded)
                pl.BlockSpec((_OUT_ROWS, 1), lambda i: (0, 0)),    # b3 (padded)
            ],
            out_specs=pl.BlockSpec((_OUT_ROWS, tb), lambda i: (0, i)),
        ),
        compiler_params=pltpu.CompilerParams(
            dimension_semantics=("parallel",),
        ),
        cost_estimate=pl.CostEstimate(
            flops=flops, transcendentals=0, bytes_accessed=bytes_accessed),
    )(x, w1p, b1p, w2p, b2p, w3t, b3t)

    # Row 0 holds the real logit; padded/garbage batch columns are row-local.
    return out[0, :B].reshape(B, 1)


def discriminator_ref(img, params):
    # Pure-JAX reference with the same bf16-matmul / f32-elementwise precision.
    (w1, b1), (w2, b2), (w3, b3) = params
    x = img.reshape(img.shape[0], -1).astype(jnp.bfloat16)
    h1 = _leaky_relu(
        jnp.dot(x, w1.astype(jnp.bfloat16), preferred_element_type=jnp.float32) + b1)
    h2 = _leaky_relu(
        jnp.dot(h1.astype(jnp.bfloat16), w2.astype(jnp.bfloat16),
                preferred_element_type=jnp.float32) + b2)
    return (jnp.dot(h2.astype(jnp.bfloat16), w3.astype(jnp.bfloat16),
                    preferred_element_type=jnp.float32) + b3)


if __name__ == "__main__":
    img_shape = (1, 28, 28)     # C, H, W  (prod = 784)
    batch = 4

    key = jax.random.PRNGKey(0)
    k_img, k_p = jax.random.split(key)
    img = jax.random.normal(k_img, (batch,) + img_shape, jnp.float32)

    params = init_params(k_p, img_shape)
    packed = pack_params(params)

    validity = discriminator_forward(img, packed)
    validity = jax.block_until_ready(validity)

    ref = discriminator_ref(img, params)
    assert validity.shape == (batch, 1)
    np.testing.assert_allclose(np.asarray(validity), np.asarray(ref),
                               atol=1e-2, rtol=1e-2)

    print("KERNEL_OK")
</pallas_src>

<mosaic_0001>
module attributes {stable_mosaic.version = 11 : i64} {
  func.func @discriminator_kernel(%arg0: i32, %arg1: memref<16x784xf32, #tpu.memory_space<vmem>>, %arg2: memref<784x512xbf16, #tpu.memory_space<vmem>>, %arg3: memref<1x512xf32, #tpu.memory_space<vmem>>, %arg4: memref<512x256xbf16, #tpu.memory_space<vmem>>, %arg5: memref<1x256xf32, #tpu.memory_space<vmem>>, %arg6: memref<8x256xbf16, #tpu.memory_space<vmem>>, %arg7: memref<8x1xf32, #tpu.memory_space<vmem>>, %arg8: memref<8x16xf32, #tpu.memory_space<vmem>>) attributes {dimension_semantics = [#tpu.dimension_semantics<parallel>], iteration_bounds = array<i64: 1>, scalar_prefetch = 0 : i64, scratch_operands = 0 : i64, tpu.core_type = #tpu.core_type<tc>, window_params = [{transform_indices = @transform_0, window_bounds = array<i64: 16, 784>}, {pipeline_mode = #tpu.pipeline_mode<synchronous>, transform_indices = @transform_1, window_bounds = array<i64: 784, 512>}, {pipeline_mode = #tpu.pipeline_mode<synchronous>, transform_indices = @transform_2, window_bounds = array<i64: 1, 512>}, {pipeline_mode = #tpu.pipeline_mode<synchronous>, transform_indices = @transform_3, window_bounds = array<i64: 512, 256>}, {pipeline_mode = #tpu.pipeline_mode<synchronous>, transform_indices = @transform_4, window_bounds = array<i64: 1, 256>}, {pipeline_mode = #tpu.pipeline_mode<synchronous>, transform_indices = @transform_5, window_bounds = array<i64: 8, 256>}, {pipeline_mode = #tpu.pipeline_mode<synchronous>, transform_indices = @transform_6, window_bounds = array<i64: 8, 1>}, {transform_indices = @transform_7, window_bounds = array<i64: 8, 16>}]} {
    %c0 = arith.constant 0 : index
    %c0_0 = arith.constant 0 : index
    %0 = vector.load %arg1[%c0, %c0_0] : memref<16x784xf32, #tpu.memory_space<vmem>>, vector<16x784xf32>
    %1 = arith.truncf %0 : vector<16x784xf32> to vector<16x784xbf16>
    %c0_1 = arith.constant 0 : index
    %c0_2 = arith.constant 0 : index
    %2 = vector.load %arg2[%c0_1, %c0_2] : memref<784x512xbf16, #tpu.memory_space<vmem>>, vector<784x512xbf16>
    %cst = arith.constant dense<0.000000e+00> : vector<16x512xf32>
    %3 = tpu.matmul %1, %2, %cst {dimension_numbers = #tpu.dot_dimension_numbers<[1], [0], [0], [1], [0, 0, 1, 1], [], []>} : vector<16x784xbf16>, vector<784x512xbf16>, vector<16x512xf32> -> vector<16x512xf32>
    %c0_3 = arith.constant 0 : index
    %c0_4 = arith.constant 0 : index
    %4 = vector.load %arg3[%c0_3, %c0_4] : memref<1x512xf32, #tpu.memory_space<vmem>>, vector<1x512xf32>
    %5 = vector.broadcast %4 : vector<1x512xf32> to vector<16x512xf32>
    %6 = arith.addf %3, %5 : vector<16x512xf32>
    %cst_5 = arith.constant 0.000000e+00 : f32
    %7 = vector.broadcast %cst_5 : f32 to vector<16x512xf32>
    %8 = arith.cmpf ogt, %6, %7 : vector<16x512xf32>
    %cst_6 = arith.constant 2.000000e-01 : f32
    %9 = vector.broadcast %cst_6 : f32 to vector<16x512xf32>
    %10 = arith.mulf %9, %6 : vector<16x512xf32>
    %11 = arith.select %8, %6, %10 : vector<16x512xi1>, vector<16x512xf32>
    %12 = arith.truncf %11 : vector<16x512xf32> to vector<16x512xbf16>
    %c0_7 = arith.constant 0 : index
    %c0_8 = arith.constant 0 : index
    %13 = vector.load %arg4[%c0_7, %c0_8] : memref<512x256xbf16, #tpu.memory_space<vmem>>, vector<512x256xbf16>
    %cst_9 = arith.constant dense<0.000000e+00> : vector<16x256xf32>
    %14 = tpu.matmul %12, %13, %cst_9 {dimension_numbers = #tpu.dot_dimension_numbers<[1], [0], [0], [1], [0, 0, 1, 1], [], []>} : vector<16x512xbf16>, vector<512x256xbf16>, vector<16x256xf32> -> vector<16x256xf32>
    %c0_10 = arith.constant 0 : index
    %c0_11 = arith.constant 0 : index
    %15 = vector.load %arg5[%c0_10, %c0_11] : memref<1x256xf32, #tpu.memory_space<vmem>>, vector<1x256xf32>
    %16 = vector.broadcast %15 : vector<1x256xf32> to vector<16x256xf32>
    %17 = arith.addf %14, %16 : vector<16x256xf32>
    %cst_12 = arith.constant 0.000000e+00 : f32
    %18 = vector.broadcast %cst_12 : f32 to vector<16x256xf32>
    %19 = arith.cmpf ogt, %17, %18 : vector<16x256xf32>
    %cst_13 = arith.constant 2.000000e-01 : f32
    %20 = vector.broadcast %cst_13 : f32 to vector<16x256xf32>
    %21 = arith.mulf %20, %17 : vector<16x256xf32>
    %22 = arith.select %19, %17, %21 : vector<16x256xi1>, vector<16x256xf32>
    %23 = arith.truncf %22 : vector<16x256xf32> to vector<16x256xbf16>
    %c0_14 = arith.constant 0 : index
    %c0_15 = arith.constant 0 : index
    %24 = vector.load %arg6[%c0_14, %c0_15] : memref<8x256xbf16, #tpu.memory_space<vmem>>, vector<8x256xbf16>
    %cst_16 = arith.constant dense<0.000000e+00> : vector<8x16xf32>
    %25 = tpu.matmul %24, %23, %cst_16 {dimension_numbers = #tpu.dot_dimension_numbers<[1], [1], [0], [0], [0, 0, 1, 0], [], []>} : vector<8x256xbf16>, vector<16x256xbf16>, vector<8x16xf32> -> vector<8x16xf32>
    %c0_17 = arith.constant 0 : index
    %c0_18 = arith.constant 0 : index
    %26 = vector.load %arg7[%c0_17, %c0_18] : memref<8x1xf32, #tpu.memory_space<vmem>>, vector<8x1xf32>
    %27 = vector.broadcast %26 : vector<8x1xf32> to vector<8x16xf32>
    %28 = arith.addf %25, %27 : vector<8x16xf32>
    %c0_19 = arith.constant 0 : index
    %c0_20 = arith.constant 0 : index
    %29 = vector.load %arg8[%c0_19, %c0_20] : memref<8x16xf32, #tpu.memory_space<vmem>>, vector<8x16xf32>
    tpu.vector_store %arg8[%c0_19, %c0_20], %28 {strides = array<i32>} : memref<8x16xf32, #tpu.memory_space<vmem>>, vector<8x16xf32>,
    return
  }
  func.func @transform_0(%arg0: i32) -> (i32, i32) {
    %c0_i32 = arith.constant 0 : i32
    %c0_i32_0 = arith.constant 0 : i32
    return %arg0, %c0_i32 : i32, i32
  }
  func.func @transform_1(%arg0: i32) -> (i32, i32) {
    %c0_i32 = arith.constant 0 : i32
    %c0_i32_0 = arith.constant 0 : i32
    %c0_i32_1 = arith.constant 0 : i32
    return %c0_i32, %c0_i32_0 : i32, i32
  }
  func.func @transform_2(%arg0: i32) -> (i32, i32) {
    %c0_i32 = arith.constant 0 : i32
    %c0_i32_0 = arith.constant 0 : i32
    %c0_i32_1 = arith.constant 0 : i32
    return %c0_i32, %c0_i32_0 : i32, i32
  }
  func.func @transform_3(%arg0: i32) -> (i32, i32) {
    %c0_i32 = arith.constant 0 : i32
    %c0_i32_0 = arith.constant 0 : i32
    %c0_i32_1 = arith.constant 0 : i32
    return %c0_i32, %c0_i32_0 : i32, i32
  }
  func.func @transform_4(%arg0: i32) -> (i32, i32) {
    %c0_i32 = arith.constant 0 : i32
    %c0_i32_0 = arith.constant 0 : i32
    %c0_i32_1 = arith.constant 0 : i32
    return %c0_i32, %c0_i32_0 : i32, i32
  }
  func.func @transform_5(%arg0: i32) -> (i32, i32) {
    %c0_i32 = arith.constant 0 : i32
    %c0_i32_0 = arith.constant 0 : i32
    %c0_i32_1 = arith.constant 0 : i32
    return %c0_i32, %c0_i32_0 : i32, i32
  }
  func.func @transform_6(%arg0: i32) -> (i32, i32) {
    %c0_i32 = arith.constant 0 : i32
    %c0_i32_0 = arith.constant 0 : i32
    %c0_i32_1 = arith.constant 0 : i32
    return %c0_i32, %c0_i32_0 : i32, i32
  }
  func.func @transform_7(%arg0: i32) -> (i32, i32) {
    %c0_i32 = arith.constant 0 : i32
    %c0_i32_0 = arith.constant 0 : i32
    return %c0_i32, %arg0 : i32, i32
  }
}

</mosaic_0001>

<llo_original>
// kernel: tpu_custom_call.1
$region0: #{tpu_custom_call.1}
  #allocation0 [shape = 'u32[]', space=smem, size = 0x4, offset = 0x4, fixed_abs, tag = 'smem constant byte address 0x4 - core index']
  #allocation1 [shape = 'u32[144,128]{1,0:T(1,128)}', space=vmem, size = 0x12000, scoped, tag = 'internal scratch']
  %s0 = inlined_call_operand.hbm [shape: f32[4,784], index: 0, kind: input, shape index: {}]
  %s1 = inlined_call_operand.hbm [shape: bf16[784,512], index: 1, kind: input, shape index: {}]
  %s2 = inlined_call_operand.vmem [shape: f32[1,512], index: 2, kind: input, shape index: {}]
  %s3 = inlined_call_operand.hbm [shape: bf16[512,256], index: 3, kind: input, shape index: {}]
  %s4 = inlined_call_operand.vmem [shape: f32[1,256], index: 4, kind: input, shape index: {}]
  %s5 = inlined_call_operand.vmem [shape: bf16[8,256], index: 5, kind: input, shape index: {}]
  %s6 = inlined_call_operand.vmem [shape: f32[8,1], index: 6, kind: input, shape index: {}]
  %s7 = inlined_call_operand.hbm [shape: f32[8,16], index: 7, kind: output, shape index: {}]
  %s8 = sld [smem:[#allocation0]]
  $region50: #{tpu_custom_call.1} parent=0
    _
  %s10 = ssub.s32 1, %s8
  %s11 = scalar_select 0, %s10, %s8
  $region1: #{tpu_custom_call.1} parent=0
    #allocation2 [shape = 'u8[57344]{0}', space=vmem, size = 0xe000, scoped, tag = 'input window, operand 0, single buffered']
    #allocation3 [shape = 's32[1]{0}', space=sflag, size = 0x4, scoped, tag = 'scoped memory for tpu_custom_call.1']
    #allocation4 [shape = 's32[1]{0}', space=sflag, size = 0x4, scoped, tag = 'scoped memory for tpu_custom_call.1']
    #allocation5 [shape = 'u8[802816]{0}', space=vmem, size = 0xc4000, scoped, tag = 'input window, operand 1, single buffered']
    #allocation6 [shape = 's32[1]{0}', space=sflag, size = 0x4, scoped, tag = 'scoped memory for tpu_custom_call.1']
    #allocation7 [shape = 'u8[262144]{0}', space=vmem, size = 0x40000, scoped, tag = 'input window, operand 3, single buffered']
    #allocation8 [shape = 'u8[4096]{0}', space=vmem, size = 0x1000, scoped, tag = 'output window, operand 0, single buffered']
    %12 = vsyncpa [#allocation3], 0
    %13 = vsyncpa [#allocation6], 0
    %14 = vsyncpa [#allocation4], 0
    // Predicated region
    $region2: #{tpu_custom_call.1} parent=1 // pred_check
      _
    $region3: #{tpu_custom_call.1} parent=1 // pred_check_branch
      %16 = sbr.rel (0) target = $region5
    $region4: #{tpu_custom_call.1} parent=1 // pred_region
      %s18 = ssub.s32 1792, 448
      %19 = vsyncadd [#allocation3], %s18
      %s20 = sshll.u32 [#allocation2], 4
      %s21 = int_to_ptr.vmem [resolvable:$true] %s20
      %26 = dma.hbm_to_vmem [thread:$0]  %s0, 448, %s21, [#allocation3], 448, 448, 28
    $region5: #{tpu_custom_call.1} parent=1 // pred_fallthru
      _
    // Predicated region
    $region6: #{tpu_custom_call.1} parent=1 // pred_check
      _
    $region7: #{tpu_custom_call.1} parent=1 // pred_check_branch
      %28 = sbr.rel (0) target = $region9
    $region8: #{tpu_custom_call.1} parent=1 // pred_region
      %s30 = ssub.s32 25088, 25088
      %31 = vsyncadd [#allocation6], %s30
      %s32 = sshll.u32 [#allocation5], 4
      %s33 = int_to_ptr.vmem [resolvable:$true] %s32
      %38 = dma.hbm_to_vmem [thread:$0]  %s1, 25088, %s33, [#allocation6], 256, 256, 16
    $region9: #{tpu_custom_call.1} parent=1 // pred_fallthru
      _
    // Predicated region
    $region10: #{tpu_custom_call.1} parent=1 // pred_check
      _
    $region11: #{tpu_custom_call.1} parent=1 // pred_check_branch
      %40 = sbr.rel (0) target = $region13
    $region12: #{tpu_custom_call.1} parent=1 // pred_region
      _
    $region13: #{tpu_custom_call.1} parent=1 // pred_fallthru
      _
    // Predicated region
    $region14: #{tpu_custom_call.1} parent=1 // pred_check
      _
    $region15: #{tpu_custom_call.1} parent=1 // pred_check_branch
      %42 = sbr.rel (0) target = $region17
    $region16: #{tpu_custom_call.1} parent=1 // pred_region
      %s44 = ssub.s32 8192, 8192
      %45 = vsyncadd [#allocation6], %s44
      %s46 = sshll.u32 [#allocation7], 4
      %s47 = int_to_ptr.vmem [resolvable:$true] %s46
      %52 = dma.hbm_to_vmem [thread:$0]  %s3, 8192, %s47, [#allocation6], 128, 128, 8
    $region17: #{tpu_custom_call.1} parent=1 // pred_fallthru
      _
    // Predicated region
    $region18: #{tpu_custom_call.1} parent=1 // pred_check
      _
    $region19: #{tpu_custom_call.1} parent=1 // pred_check_branch
      %54 = sbr.rel (0) target = $region21
    $region20: #{tpu_custom_call.1} parent=1 // pred_region
      _
    $region21: #{tpu_custom_call.1} parent=1 // pred_fallthru
      _
    // Predicated region
    $region22: #{tpu_custom_call.1} parent=1 // pred_check
      _
    $region23: #{tpu_custom_call.1} parent=1 // pred_check_branch
      %56 = sbr.rel (0) target = $region25
    $region24: #{tpu_custom_call.1} parent=1 // pred_region
      _
    $region25: #{tpu_custom_call.1} parent=1 // pred_fallthru
      _
    // Predicated region
    $region26: #{tpu_custom_call.1} parent=1 // pred_check
      _
    $region27: #{tpu_custom_call.1} parent=1 // pred_check_branch
      %58 = sbr.rel (0) target = $region29
    $region28: #{tpu_custom_call.1} parent=1 // pred_region
      _
    $region29: #{tpu_custom_call.1} parent=1 // pred_fallthru
      _
    // Predicated region
    $region30: #{tpu_custom_call.1} parent=1 // pred_check
      _
    $region31: #{tpu_custom_call.1} parent=1 // pred_check_branch
      %60 = sbr.rel (0) target = $region33
    $region32: #{tpu_custom_call.1} parent=1 // pred_region
      %61 = dma.done [#allocation3], 1792
    $region33: #{tpu_custom_call.1} parent=1 // pred_fallthru
      _
    // Predicated region
    $region34: #{tpu_custom_call.1} parent=1 // pred_check
      _
    $region35: #{tpu_custom_call.1} parent=1 // pred_check_branch
      %63 = sbr.rel (0) target = $region37
    $region36: #{tpu_custom_call.1} parent=1 // pred_region
      %64 = dma.done [#allocation6], 25088
    $region37: #{tpu_custom_call.1} parent=1 // pred_fallthru
      _
    // Predicated region
    $region38: #{tpu_custom_call.1} parent=1 // pred_check
      _
    $region39: #{tpu_custom_call.1} parent=1 // pred_check_branch
      %66 = sbr.rel (0) target = $region41
    $region40: #{tpu_custom_call.1} parent=1 // pred_region
      %67 = dma.done [#allocation6], 8192
    $region41: #{tpu_custom_call.1} parent=1 // pred_fallthru
      _
    %v69 = vld [vmem:[#allocation2] sm:$0xff]
    %v70 = vld [vmem:[#allocation2 + $0x8] sm:$0xff]
    %v71 = vld [vmem:[#allocation2 + $0x10] sm:$0xff]
    %v72 = vld [vmem:[#allocation2 + $0x18] sm:$0xf]
    %v73 = vld [vmem:[#allocation2 + $0x1c] sm:$0xff]
    %v74 = vld [vmem:[#allocation2 + $0x24] sm:$0xff]
    %v75 = vld [vmem:[#allocation2 + $0x2c] sm:$0xff]
    %v76 = vld [vmem:[#allocation2 + $0x34] sm:$0xf]
    %v77 = vld [vmem:[#allocation2 + $0x38] sm:$0xff]
    %v78 = vld [vmem:[#allocation2 + $0x40] sm:$0xff]
    %v79 = vld [vmem:[#allocation2 + $0x48] sm:$0xff]
    %v80 = vld [vmem:[#allocation2 + $0x50] sm:$0xf]
    %v81 = vld [vmem:[#allocation2 + $0x54] sm:$0xff]
    %v82 = vld [vmem:[#allocation2 + $0x5c] sm:$0xff]
    %v83 = vld [vmem:[#allocation2 + $0x64] sm:$0xff]
    %v84 = vld [vmem:[#allocation2 + $0x6c] sm:$0xf]
    %v101 = vcombine.low %v69, %v73
    %v102 = vcombine.high %v69, %v73
    %v103 = vcombine.low %v70, %v74
    %v104 = vcombine.high %v70, %v74
    %v105 = vcombine.low %v71, %v75
    %v106 = vcombine.high %v71, %v75
    %v107 = vcombine.low %v72, %v76
    %v108 = vcombine.low %v77, %v81
    %v109 = vcombine.high %v77, %v81
    %v110 = vcombine.low %v78, %v82
    %v111 = vcombine.high %v78, %v82
    %v112 = vcombine.low %v79, %v83
    %v113 = vcombine.high %v79, %v83
    %v114 = vcombine.low %v80, %v84
    %v129 = vpack.c.bf16 %v108, %v101
    %v130 = vpack.c.bf16 %v109, %v102
    %v131 = vpack.c.bf16 %v110, %v103
    %v132 = vpack.c.bf16 %v111, %v104
    %v133 = vpack.c.bf16 %v112, %v105
    %v134 = vpack.c.bf16 %v113, %v106
    %v135 = vpack.c.bf16 %v114, %v107
    %v136 = vld [vmem:[#allocation5] sm:$0xff]
    %v137 = vld [vmem:[#allocation5 + $0x8] sm:$0xff]
    %v138 = vld [vmem:[#allocation5 + $0x10] sm:$0xff]
    %v139 = vld [vmem:[#allocation5 + $0x18] sm:$0xff]
    %v140 = vld [vmem:[#allocation5 + $0x20] sm:$0xff]
    %v141 = vld [vmem:[#allocation5 + $0x28] sm:$0xff]
    %v142 = vld [vmem:[#allocation5 + $0x30] sm:$0xff]
    %v143 = vld [vmem:[#allocation5 + $0x38] sm:$0xff]
    %v144 = vld [vmem:[#allocation5 + $0x40] sm:$0xff]
    %v145 = vld [vmem:[#allocation5 + $0x48] sm:$0xff]
    %v146 = vld [vmem:[#allocation5 + $0x50] sm:$0xff]
    %v147 = vld [vmem:[#allocation5 + $0x58] sm:$0xff]
    %v148 = vld [vmem:[#allocation5 + $0x60] sm:$0xff]
    %v149 = vld [vmem:[#allocation5 + $0x68] sm:$0xff]
    %v150 = vld [vmem:[#allocation5 + $0x70] sm:$0xff]
    %v151 = vld [vmem:[#allocation5 + $0x78] sm:$0xff]
    %v152 = vld [vmem:[#allocation5 + $0x80] sm:$0xff]
    %v153 = vld [vmem:[#allocation5 + $0x88] sm:$0xff]
    %v154 = vld [vmem:[#allocation5 + $0x90] sm:$0xff]
    %v155 = vld [vmem:[#allocation5 + $0x98] sm:$0xff]
    %v156 = vld [vmem:[#allocation5 + $0xa0] sm:$0xff]
    %v157 = vld [vmem:[#allocation5 + $0xa8] sm:$0xff]
    %v158 = vld [vmem:[#allocation5 + $0xb0] sm:$0xff]
    %v159 = vld [vmem:[#allocation5 + $0xb8] sm:$0xff]
    %v160 = vld [vmem:[#allocation5 + $0xc0] sm:$0xff]
    %v161 = vld [vmem:[#allocation5 + $0xc8] sm:$0xff]
    %v162 = vld [vmem:[#allocation5 + $0xd0] sm:$0xff]
    %v163 = vld [vmem:[#allocation5 + $0xd8] sm:$0xff]
    %v164 = vld [vmem:[#allocation5 + $0xe0] sm:$0xff]
    %v165 = vld [vmem:[#allocation5 + $0xe8] sm:$0xff]
    %v166 = vld [vmem:[#allocation5 + $0xf0] sm:$0xff]
    %v167 = vld [vmem:[#allocation5 + $0xf8] sm:$0xff]
    %v168 = vld [vmem:[#allocation5 + $0x100] sm:$0xff]
    %v169 = vld [vmem:[#allocation5 + $0x108] sm:$0xff]
    %v170 = vld [vmem:[#allocation5 + $0x110] sm:$0xff]
    %v171 = vld [vmem:[#allocation5 + $0x118] sm:$0xff]
    %v172 = vld [vmem:[#allocation5 + $0x120] sm:$0xff]
    %v173 = vld [vmem:[#allocation5 + $0x128] sm:$0xff]
    %v174 = vld [vmem:[#allocation5 + $0x130] sm:$0xff]
    %v175 = vld [vmem:[#allocation5 + $0x138] sm:$0xff]
    %v176 = vld [vmem:[#allocation5 + $0x140] sm:$0xff]
    %v177 = vld [vmem:[#allocation5 + $0x148] sm:$0xff]
    %v178 = vld [vmem:[#allocation5 + $0x150] sm:$0xff]
    %v179 = vld [vmem:[#allocation5 + $0x158] sm:$0xff]
    %v180 = vld [vmem:[#allocation5 + $0x160] sm:$0xff]
    %v181 = vld [vmem:[#allocation5 + $0x168] sm:$0xff]
    %v182 = vld [vmem:[#allocation5 + $0x170] sm:$0xff]
    %v183 = vld [vmem:[#allocation5 + $0x178] sm:$0xff]
    %v184 = vld [vmem:[#allocation5 + $0x180] sm:$0xff]
    %v185 = vld [vmem:[#allocation5 + $0x188] sm:$0xff]
    %v186 = vld [vmem:[#allocation5 + $0x190] sm:$0xff]
    %v187 = vld [vmem:[#allocation5 + $0x198] sm:$0xff]
    %v188 = vld [vmem:[#allocation5 + $0x1a0] sm:$0xff]
    %v189 = vld [vmem:[#allocation5 + $0x1a8] sm:$0xff]
    %v190 = vld [vmem:[#allocation5 + $0x1b0] sm:$0xff]
    %v191 = vld [vmem:[#allocation5 + $0x1b8] sm:$0xff]
    %v192 = vld [vmem:[#allocation5 + $0x1c0] sm:$0xff]
    %v193 = vld [vmem:[#allocation5 + $0x1c8] sm:$0xff]
    %v194 = vld [vmem:[#allocation5 + $0x1d0] sm:$0xff]
    %v195 = vld [vmem:[#allocation5 + $0x1d8] sm:$0xff]
    %v196 = vld [vmem:[#allocation5 + $0x1e0] sm:$0xff]
    %v197 = vld [vmem:[#allocation5 + $0x1e8] sm:$0xff]
    %v198 = vld [vmem:[#allocation5 + $0x1f0] sm:$0xff]
    %v199 = vld [vmem:[#allocation5 + $0x1f8] sm:$0xff]
    %v200 = vld [vmem:[#allocation5 + $0x200] sm:$0xff]
    %v201 = vld [vmem:[#allocation5 + $0x208] sm:$0xff]
    %v202 = vld [vmem:[#allocation5 + $0x210] sm:$0xff]
    %v203 = vld [vmem:[#allocation5 + $0x218] sm:$0xff]
    %v204 = vld [vmem:[#allocation5 + $0x220] sm:$0xff]
    %v205 = vld [vmem:[#allocation5 + $0x228] sm:$0xff]
    %v206 = vld [vmem:[#allocation5 + $0x230] sm:$0xff]
    %v207 = vld [vmem:[#allocation5 + $0x238] sm:$0xff]
    %v208 = vld [vmem:[#allocation5 + $0x240] sm:$0xff]
    %v209 = vld [vmem:[#allocation5 + $0x248] sm:$0xff]
    %v210 = vld [vmem:[#allocation5 + $0x250] sm:$0xff]
    %v211 = vld [vmem:[#allocation5 + $0x258] sm:$0xff]
    %v212 = vld [vmem:[#allocation5 + $0x260] sm:$0xff]
    %v213 = vld [vmem:[#allocation5 + $0x268] sm:$0xff]
    %v214 = vld [vmem:[#allocation5 + $0x270] sm:$0xff]
    %v215 = vld [vmem:[#allocation5 + $0x278] sm:$0xff]
    %v216 = vld [vmem:[#allocation5 + $0x280] sm:$0xff]
    %v217 = vld [vmem:[#allocation5 + $0x288] sm:$0xff]
    %v218 = vld [vmem:[#allocation5 + $0x290] sm:$0xff]
    %v219 = vld [vmem:[#allocation5 + $0x298] sm:$0xff]
    %v220 = vld [vmem:[#allocation5 + $0x2a0] sm:$0xff]
    %v221 = vld [vmem:[#allocation5 + $0x2a8] sm:$0xff]
    %v222 = vld [vmem:[#allocation5 + $0x2b0] sm:$0xff]
    %v223 = vld [vmem:[#allocation5 + $0x2b8] sm:$0xff]
    %v224 = vld [vmem:[#allocation5 + $0x2c0] sm:$0xff]
    %v225 = vld [vmem:[#allocation5 + $0x2c8] sm:$0xff]
    %v226 = vld [vmem:[#allocation5 + $0x2d0] sm:$0xff]
    %v227 = vld [vmem:[#allocation5 + $0x2d8] sm:$0xff]
    %v228 = vld [vmem:[#allocation5 + $0x2e0] sm:$0xff]
    %v229 = vld [vmem:[#allocation5 + $0x2e8] sm:$0xff]
    %v230 = vld [vmem:[#allocation5 + $0x2f0] sm:$0xff]
    %v231 = vld [vmem:[#allocation5 + $0x2f8] sm:$0xff]
    %v232 = vld [vmem:[#allocation5 + $0x300] sm:$0xff]
    %v233 = vld [vmem:[#allocation5 + $0x308] sm:$0xff]
    %v234 = vld [vmem:[#allocation5 + $0x310] sm:$0xff]
    %v235 = vld [vmem:[#allocation5 + $0x318] sm:$0xff]
    %v236 = vld [vmem:[#allocation5 + $0x320] sm:$0xff]
    %v237 = vld [vmem:[#allocation5 + $0x328] sm:$0xff]
    %v238 = vld [vmem:[#allocation5 + $0x330] sm:$0xff]
    %v239 = vld [vmem:[#allocation5 + $0x338] sm:$0xff]
    %v240 = vld [vmem:[#allocation5 + $0x340] sm:$0xff]
    %v241 = vld [vmem:[#allocation5 + $0x348] sm:$0xff]
    %v242 = vld [vmem:[#allocation5 + $0x350] sm:$0xff]
    %v243 = vld [vmem:[#allocation5 + $0x358] sm:$0xff]
    %v244 = vld [vmem:[#allocation5 + $0x360] sm:$0xff]
    %v245 = vld [vmem:[#allocation5 + $0x368] sm:$0xff]
    %v246 = vld [vmem:[#allocation5 + $0x370] sm:$0xff]
    %v247 = vld [vmem:[#allocation5 + $0x378] sm:$0xff]
    %v248 = vld [vmem:[#allocation5 + $0x380] sm:$0xff]
    %v249 = vld [vmem:[#allocation5 + $0x388] sm:$0xff]
    %v250 = vld [vmem:[#allocation5 + $0x390] sm:$0xff]
    %v251 = vld [vmem:[#allocation5 + $0x398] sm:$0xff]
    %v252 = vld [vmem:[#allocation5 + $0x3a0] sm:$0xff]
    %v253 = vld [vmem:[#allocation5 + $0x3a8] sm:$0xff]
    %v254 = vld [vmem:[#allocation5 + $0x3b0] sm:$0xff]
    %v255 = vld [vmem:[#allocation5 + $0x3b8] sm:$0xff]
    %v256 = vld [vmem:[#allocation5 + $0x3c0] sm:$0xff]
    %v257 = vld [vmem:[#allocation5 + $0x3c8] sm:$0xff]
    %v258 = vld [vmem:[#allocation5 + $0x3d0] sm:$0xff]
    %v259 = vld [vmem:[#allocation5 + $0x3d8] sm:$0xff]
    %v260 = vld [vmem:[#allocation5 + $0x3e0] sm:$0xff]
    %v261 = vld [vmem:[#allocation5 + $0x3e8] sm:$0xff]
    %v262 = vld [vmem:[#allocation5 + $0x3f0] sm:$0xff]
    %v263 = vld [vmem:[#allocation5 + $0x3f8] sm:$0xff]
    %v264 = vld [vmem:[#allocation5 + $0x400] sm:$0xff]
    %v265 = vld [vmem:[#allocation5 + $0x408] sm:$0xff]
    %v266 = vld [vmem:[#allocation5 + $0x410] sm:$0xff]
    %v267 = vld [vmem:[#allocation5 + $0x418] sm:$0xff]
    %v268 = vld [vmem:[#allocation5 + $0x420] sm:$0xff]
    %v269 = vld [vmem:[#allocation5 + $0x428] sm:$0xff]
    %v270 = vld [vmem:[#allocation5 + $0x430] sm:$0xff]
    %v271 = vld [vmem:[#allocation5 + $0x438] sm:$0xff]
    %v272 = vld [vmem:[#allocation5 + $0x440] sm:$0xff]
    %v273 = vld [vmem:[#allocation5 + $0x448] sm:$0xff]
    %v274 = vld [vmem:[#allocation5 + $0x450] sm:$0xff]
    %v275 = vld [vmem:[#allocation5 + $0x458] sm:$0xff]
    %v276 = vld [vmem:[#allocation5 + $0x460] sm:$0xff]
    %v277 = vld [vmem:[#allocation5 + $0x468] sm:$0xff]
    %v278 = vld [vmem:[#allocation5 + $0x470] sm:$0xff]
    %v279 = vld [vmem:[#allocation5 + $0x478] sm:$0xff]
    %v280 = vld [vmem:[#allocation5 + $0x480] sm:$0xff]
    %v281 = vld [vmem:[#allocation5 + $0x488] sm:$0xff]
    %v282 = vld [vmem:[#allocation5 + $0x490] sm:$0xff]
    %v283 = vld [vmem:[#allocation5 + $0x498] sm:$0xff]
    %v284 = vld [vmem:[#allocation5 + $0x4a0] sm:$0xff]
    %v285 = vld [vmem:[#allocation5 + $0x4a8] sm:$0xff]
    %v286 = vld [vmem:[#allocation5 + $0x4b0] sm:$0xff]
    %v287 = vld [vmem:[#allocation5 + $0x4b8] sm:$0xff]
    %v288 = vld [vmem:[#allocation5 + $0x4c0] sm:$0xff]
    %v289 = vld [vmem:[#allocation5 + $0x4c8] sm:$0xff]
    %v290 = vld [vmem:[#allocation5 + $0x4d0] sm:$0xff]
    %v291 = vld [vmem:[#allocation5 + $0x4d8] sm:$0xff]
    %v292 = vld [vmem:[#allocation5 + $0x4e0] sm:$0xff]
    %v293 = vld [vmem:[#allocation5 + $0x4e8] sm:$0xff]
    %v294 = vld [vmem:[#allocation5 + $0x4f0] sm:$0xff]
    %v295 = vld [vmem:[#allocation5 + $0x4f8] sm:$0xff]
    %v296 = vld [vmem:[#allocation5 + $0x500] sm:$0xff]
    %v297 = vld [vmem:[#allocation5 + $0x508] sm:$0xff]
    %v298 = vld [vmem:[#allocation5 + $0x510] sm:$0xff]
    %v299 = vld [vmem:[#allocation5 + $0x518] sm:$0xff]
    %v300 = vld [vmem:[#allocation5 + $0x520] sm:$0xff]
    %v301 = vld [vmem:[#allocation5 + $0x528] sm:$0xff]
    %v302 = vld [vmem:[#allocation5 + $0x530] sm:$0xff]
    %v303 = vld [vmem:[#allocation5 + $0x538] sm:$0xff]
    %v304 = vld [vmem:[#allocation5 + $0x540] sm:$0xff]
    %v305 = vld [vmem:[#allocation5 + $0x548] sm:$0xff]
    %v306 = vld [vmem:[#allocation5 + $0x550] sm:$0xff]
    %v307 = vld [vmem:[#allocation5 + $0x558] sm:$0xff]
    %v308 = vld [vmem:[#allocation5 + $0x560] sm:$0xff]
    %v309 = vld [vmem:[#allocation5 + $0x568] sm:$0xff]
    %v310 = vld [vmem:[#allocation5 + $0x570] sm:$0xff]
    %v311 = vld [vmem:[#allocation5 + $0x578] sm:$0xff]
    %v312 = vld [vmem:[#allocation5 + $0x580] sm:$0xff]
    %v313 = vld [vmem:[#allocation5 + $0x588] sm:$0xff]
    %v314 = vld [vmem:[#allocation5 + $0x590] sm:$0xff]
    %v315 = vld [vmem:[#allocation5 + $0x598] sm:$0xff]
    %v316 = vld [vmem:[#allocation5 + $0x5a0] sm:$0xff]
    %v317 = vld [vmem:[#allocation5 + $0x5a8] sm:$0xff]
    %v318 = vld [vmem:[#allocation5 + $0x5b0] sm:$0xff]
    %v319 = vld [vmem:[#allocation5 + $0x5b8] sm:$0xff]
    %v320 = vld [vmem:[#allocation5 + $0x5c0] sm:$0xff]
    %v321 = vld [vmem:[#allocation5 + $0x5c8] sm:$0xff]
    %v322 = vld [vmem:[#allocation5 + $0x5d0] sm:$0xff]
    %v323 = vld [vmem:[#allocation5 + $0x5d8] sm:$0xff]
    %v324 = vld [vmem:[#allocation5 + $0x5e0] sm:$0xff]
    %v325 = vld [vmem:[#allocation5 + $0x5e8] sm:$0xff]
    %v326 = vld [vmem:[#allocation5 + $0x5f0] sm:$0xff]
    %v327 = vld [vmem:[#allocation5 + $0x5f8] sm:$0xff]
    %v328 = vld [vmem:[#allocation5 + $0x600] sm:$0xff]
    %v329 = vld [vmem:[#allocation5 + $0x608] sm:$0xff]
    %v330 = vld [vmem:[#allocation5 + $0x610] sm:$0xff]
    %v331 = vld [vmem:[#allocation5 + $0x618] sm:$0xff]
    %v332 = vld [vmem:[%s2] sm:$0xf]
    %v334 = vlaneseq
    %v335 = vshrl.u32 %v334, 7
    %v336 = vsub.s32 0, %v335
    %v337 = vrot.slane %v332, %v336
    %v338 = vlaneseq
    %v339 = vshrl.u32 %v338, 7
    %v340 = vsub.s32 1, %v339
    %v341 = vrot.slane %v332, %v340
    %v342 = vlaneseq
    %v343 = vshrl.u32 %v342, 7
    %v344 = vsub.s32 2, %v343
    %v345 = vrot.slane %v332, %v344
    %v346 = vlaneseq
    %v347 = vshrl.u32 %v346, 7
    %v348 = vsub.s32 3, %v347
    %v349 = vrot.slane %v332, %v348
    %v550 = vunpack.c.l.b16 %v136
    %v551 = vunpack.c.h.b16 %v136
    %v552 = vunpack.c.l.b16 %v137
    %v553 = vunpack.c.h.b16 %v137
    %v554 = vunpack.c.l.b16 %v138
    %v555 = vunpack.c.h.b16 %v138
    %v556 = vunpack.c.l.b16 %v139
    %v557 = vunpack.c.h.b16 %v139
    %v558 = vunpack.c.l.b16 %v140
    %v559 = vunpack.c.h.b16 %v140
    %v560 = vunpack.c.l.b16 %v141
    %v561 = vunpack.c.h.b16 %v141
    %v562 = vunpack.c.l.b16 %v142
    %v563 = vunpack.c.h.b16 %v142
    %v564 = vunpack.c.l.b16 %v143
    %v565 = vunpack.c.h.b16 %v143
    %v566 = vunpack.c.l.b16 %v144
    %v567 = vunpack.c.h.b16 %v144
    %v568 = vunpack.c.l.b16 %v145
    %v569 = vunpack.c.h.b16 %v145
    %v570 = vunpack.c.l.b16 %v146
    %v571 = vunpack.c.h.b16 %v146
    %v572 = vunpack.c.l.b16 %v147
    %v573 = vunpack.c.h.b16 %v147
    %v574 = vunpack.c.l.b16 %v148
    %v575 = vunpack.c.h.b16 %v148
    %v576 = vunpack.c.l.b16 %v149
    %v577 = vunpack.c.h.b16 %v149
    %v578 = vunpack.c.l.b16 %v150
    %v579 = vunpack.c.h.b16 %v150
    %v580 = vunpack.c.l.b16 %v151
    %v581 = vunpack.c.h.b16 %v151
    %v582 = vunpack.c.l.b16 %v152
    %v583 = vunpack.c.h.b16 %v152
    %v584 = vunpack.c.l.b16 %v153
    %v585 = vunpack.c.h.b16 %v153
    %v586 = vunpack.c.l.b16 %v154
    %v587 = vunpack.c.h.b16 %v154
    %v588 = vunpack.c.l.b16 %v155
    %v589 = vunpack.c.h.b16 %v155
    %v590 = vunpack.c.l.b16 %v156
    %v591 = vunpack.c.h.b16 %v156
    %v592 = vunpack.c.l.b16 %v157
    %v593 = vunpack.c.h.b16 %v157
    %v594 = vunpack.c.l.b16 %v158
    %v595 = vunpack.c.h.b16 %v158
    %v596 = vunpack.c.l.b16 %v159
    %v597 = vunpack.c.h.b16 %v159
    %v598 = vunpack.c.l.b16 %v160
    %v599 = vunpack.c.h.b16 %v160
    %v600 = vunpack.c.l.b16 %v161
    %v601 = vunpack.c.h.b16 %v161
    %v602 = vunpack.c.l.b16 %v162
    %v603 = vunpack.c.h.b16 %v162
    %v604 = vunpack.c.l.b16 %v163
    %v605 = vunpack.c.h.b16 %v163
    %v606 = vunpack.c.l.b16 %v164
    %v607 = vunpack.c.h.b16 %v164
    %v608 = vunpack.c.l.b16 %v165
    %v609 = vunpack.c.h.b16 %v165
    %v610 = vunpack.c.l.b16 %v166
    %v611 = vunpack.c.h.b16 %v166
    %v612 = vunpack.c.l.b16 %v167
    %v613 = vunpack.c.h.b16 %v167
    %v614 = vunpack.c.l.b16 %v168
    %v615 = vunpack.c.h.b16 %v168
    %v616 = vunpack.c.l.b16 %v169
    %v617 = vunpack.c.h.b16 %v169
    %v618 = vunpack.c.l.b16 %v170
    %v619 = vunpack.c.h.b16 %v170
    %v620 = vunpack.c.l.b16 %v171
    %v621 = vunpack.c.h.b16 %v171
    %v622 = vunpack.c.l.b16 %v172
    %v623 = vunpack.c.h.b16 %v172
    %v624 = vunpack.c.l.b16 %v173
    %v625 = vunpack.c.h.b16 %v173
    %v626 = vunpack.c.l.b16 %v174
    %v627 = vunpack.c.h.b16 %v174
    %v628 = vunpack.c.l.b16 %v175
    %v629 = vunpack.c.h.b16 %v175
    %v630 = vunpack.c.l.b16 %v176
    %v631 = vunpack.c.h.b16 %v176
    %v632 = vunpack.c.l.b16 %v177
    %v633 = vunpack.c.h.b16 %v177
    %v634 = vunpack.c.l.b16 %v178
    %v635 = vunpack.c.h.b16 %v178
    %v636 = vunpack.c.l.b16 %v179
    %v637 = vunpack.c.h.b16 %v179
    %v638 = vunpack.c.l.b16 %v180
    %v639 = vunpack.c.h.b16 %v180
    %v640 = vunpack.c.l.b16 %v181
    %v641 = vunpack.c.h.b16 %v181
    %v642 = vunpack.c.l.b16 %v182
    %v643 = vunpack.c.h.b16 %v182
    %v644 = vunpack.c.l.b16 %v183
    %v645 = vunpack.c.h.b16 %v183
    %v646 = vunpack.c.l.b16 %v184
    %v647 = vunpack.c.h.b16 %v184
    %v648 = vunpack.c.l.b16 %v185
    %v649 = vunpack.c.h.b16 %v185
    %v650 = vunpack.c.l.b16 %v186
    %v651 = vunpack.c.h.b16 %v186
    %v652 = vunpack.c.l.b16 %v187
    %v653 = vunpack.c.h.b16 %v187
    %v654 = vunpack.c.l.b16 %v188
    %v655 = vunpack.c.h.b16 %v188
    %v656 = vunpack.c.l.b16 %v189
    %v657 = vunpack.c.h.b16 %v189
    %v658 = vunpack.c.l.b16 %v190
    %v659 = vunpack.c.h.b16 %v190
    %v660 = vunpack.c.l.b16 %v191
    %v661 = vunpack.c.h.b16 %v191
    %v662 = vunpack.c.l.b16 %v192
    %v663 = vunpack.c.h.b16 %v192
    %v664 = vunpack.c.l.b16 %v193
    %v665 = vunpack.c.h.b16 %v193
    %v666 = vunpack.c.l.b16 %v194
    %v667 = vunpack.c.h.b16 %v194
    %v668 = vunpack.c.l.b16 %v195
    %v669 = vunpack.c.h.b16 %v195
    %v670 = vunpack.c.l.b16 %v196
    %v671 = vunpack.c.h.b16 %v196
    %v672 = vunpack.c.l.b16 %v197
    %v673 = vunpack.c.h.b16 %v197
    %v674 = vunpack.c.l.b16 %v198
    %v675 = vunpack.c.h.b16 %v198
    %v676 = vunpack.c.l.b16 %v199
    %v677 = vunpack.c.h.b16 %v199
    %v678 = vunpack.c.l.b16 %v200
    %v679 = vunpack.c.h.b16 %v200
    %v680 = vunpack.c.l.b16 %v201
    %v681 = vunpack.c.h.b16 %v201
    %v682 = vunpack.c.l.b16 %v202
    %v683 = vunpack.c.h.b16 %v202
    %v684 = vunpack.c.l.b16 %v203
    %v685 = vunpack.c.h.b16 %v203
    %v686 = vunpack.c.l.b16 %v204
    %v687 = vunpack.c.h.b16 %v204
    %v688 = vunpack.c.l.b16 %v205
    %v689 = vunpack.c.h.b16 %v205
    %v690 = vunpack.c.l.b16 %v206
    %v691 = vunpack.c.h.b16 %v206
    %v692 = vunpack.c.l.b16 %v207
    %v693 = vunpack.c.h.b16 %v207
    %v694 = vunpack.c.l.b16 %v208
    %v695 = vunpack.c.h.b16 %v208
    %v696 = vunpack.c.l.b16 %v209
    %v697 = vunpack.c.h.b16 %v209
    %v698 = vunpack.c.l.b16 %v210
    %v699 = vunpack.c.h.b16 %v210
    %v700 = vunpack.c.l.b16 %v211
    %v701 = vunpack.c.h.b16 %v211
    %v702 = vunpack.c.l.b16 %v212
    %v703 = vunpack.c.h.b16 %v212
    %v704 = vunpack.c.l.b16 %v213
    %v705 = vunpack.c.h.b16 %v213
    %v706 = vunpack.c.l.b16 %v214
    %v707 = vunpack.c.h.b16 %v214
    %v708 = vunpack.c.l.b16 %v215
    %v709 = vunpack.c.h.b16 %v215
    %v710 = vunpack.c.l.b16 %v216
    %v711 = vunpack.c.h.b16 %v216
    %v712 = vunpack.c.l.b16 %v217
    %v713 = vunpack.c.h.b16 %v217
    %v714 = vunpack.c.l.b16 %v218
    %v715 = vunpack.c.h.b16 %v218
    %v716 = vunpack.c.l.b16 %v219
    %v717 = vunpack.c.h.b16 %v219
    %v718 = vunpack.c.l.b16 %v220
    %v719 = vunpack.c.h.b16 %v220
    %v720 = vunpack.c.l.b16 %v221
    %v721 = vunpack.c.h.b16 %v221
    %v722 = vunpack.c.l.b16 %v222
    %v723 = vunpack.c.h.b16 %v222
    %v724 = vunpack.c.l.b16 %v223
    %v725 = vunpack.c.h.b16 %v223
    %v726 = vunpack.c.l.b16 %v224
    %v727 = vunpack.c.h.b16 %v224
    %v728 = vunpack.c.l.b16 %v225
    %v729 = vunpack.c.h.b16 %v225
    %v730 = vunpack.c.l.b16 %v226
    %v731 = vunpack.c.h.b16 %v226
    %v732 = vunpack.c.l.b16 %v227
    %v733 = vunpack.c.h.b16 %v227
    %v734 = vunpack.c.l.b16 %v228
    %v735 = vunpack.c.h.b16 %v228
    %v736 = vunpack.c.l.b16 %v229
    %v737 = vunpack.c.h.b16 %v229
    %v738 = vunpack.c.l.b16 %v230
    %v739 = vunpack.c.h.b16 %v230
    %v740 = vunpack.c.l.b16 %v231
    %v741 = vunpack.c.h.b16 %v231
    %v742 = vunpack.c.l.b16 %v232
    %v743 = vunpack.c.h.b16 %v232
    %v744 = vunpack.c.l.b16 %v233
    %v745 = vunpack.c.h.b16 %v233
    %v746 = vunpack.c.l.b16 %v234
    %v747 = vunpack.c.h.b16 %v234
    %v748 = vunpack.c.l.b16 %v235
    %v749 = vunpack.c.h.b16 %v235
    %v750 = vunpack.c.l.b16 %v236
    %v751 = vunpack.c.h.b16 %v236
    %v752 = vunpack.c.l.b16 %v237
    %v753 = vunpack.c.h.b16 %v237
    %v754 = vunpack.c.l.b16 %v238
    %v755 = vunpack.c.h.b16 %v238
    %v756 = vunpack.c.l.b16 %v239
    %v757 = vunpack.c.h.b16 %v239
    %v758 = vunpack.c.l.b16 %v240
    %v759 = vunpack.c.h.b16 %v240
    %v760 = vunpack.c.l.b16 %v241
    %v761 = vunpack.c.h.b16 %v241
    %v762 = vunpack.c.l.b16 %v242
    %v763 = vunpack.c.h.b16 %v242
    %v764 = vunpack.c.l.b16 %v243
    %v765 = vunpack.c.h.b16 %v243
    %v766 = vunpack.c.l.b16 %v244
    %v767 = vunpack.c.h.b16 %v244
    %v768 = vunpack.c.l.b16 %v245
    %v769 = vunpack.c.h.b16 %v245
    %v770 = vunpack.c.l.b16 %v246
    %v771 = vunpack.c.h.b16 %v246
    %v772 = vunpack.c.l.b16 %v247
    %v773 = vunpack.c.h.b16 %v247
    %v774 = vunpack.c.l.b16 %v248
    %v775 = vunpack.c.h.b16 %v248
    %v776 = vunpack.c.l.b16 %v249
    %v777 = vunpack.c.h.b16 %v249
    %v778 = vunpack.c.l.b16 %v250
    %v779 = vunpack.c.h.b16 %v250
    %v780 = vunpack.c.l.b16 %v251
    %v781 = vunpack.c.h.b16 %v251
    %v782 = vunpack.c.l.b16 %v252
    %v783 = vunpack.c.h.b16 %v252
    %v784 = vunpack.c.l.b16 %v253
    %v785 = vunpack.c.h.b16 %v253
    %v786 = vunpack.c.l.b16 %v254
    %v787 = vunpack.c.h.b16 %v254
    %v788 = vunpack.c.l.b16 %v255
    %v789 = vunpack.c.h.b16 %v255
    %v790 = vunpack.c.l.b16 %v256
    %v791 = vunpack.c.h.b16 %v256
    %v792 = vunpack.c.l.b16 %v257
    %v793 = vunpack.c.h.b16 %v257
    %v794 = vunpack.c.l.b16 %v258
    %v795 = vunpack.c.h.b16 %v258
    %v796 = vunpack.c.l.b16 %v259
    %v797 = vunpack.c.h.b16 %v259
    %v798 = vunpack.c.l.b16 %v260
    %v799 = vunpack.c.h.b16 %v260
    %v800 = vunpack.c.l.b16 %v261
    %v801 = vunpack.c.h.b16 %v261
    %v802 = vunpack.c.l.b16 %v262
    %v803 = vunpack.c.h.b16 %v262
    %v804 = vunpack.c.l.b16 %v263
    %v805 = vunpack.c.h.b16 %v263
    %v806 = vunpack.c.l.b16 %v264
    %v807 = vunpack.c.h.b16 %v264
    %v808 = vunpack.c.l.b16 %v265
    %v809 = vunpack.c.h.b16 %v265
    %v810 = vunpack.c.l.b16 %v266
    %v811 = vunpack.c.h.b16 %v266
    %v812 = vunpack.c.l.b16 %v267
    %v813 = vunpack.c.h.b16 %v267
    %v814 = vunpack.c.l.b16 %v268
    %v815 = vunpack.c.h.b16 %v268
    %v816 = vunpack.c.l.b16 %v269
    %v817 = vunpack.c.h.b16 %v269
    %v818 = vunpack.c.l.b16 %v270
    %v819 = vunpack.c.h.b16 %v270
    %v820 = vunpack.c.l.b16 %v271
    %v821 = vunpack.c.h.b16 %v271
    %v822 = vunpack.c.l.b16 %v272
    %v823 = vunpack.c.h.b16 %v272
    %v824 = vunpack.c.l.b16 %v273
    %v825 = vunpack.c.h.b16 %v273
    %v826 = vunpack.c.l.b16 %v274
    %v827 = vunpack.c.h.b16 %v274
    %v828 = vunpack.c.l.b16 %v275
    %v829 = vunpack.c.h.b16 %v275
    %v830 = vunpack.c.l.b16 %v276
    %v831 = vunpack.c.h.b16 %v276
    %v832 = vunpack.c.l.b16 %v277
    %v833 = vunpack.c.h.b16 %v277
    %v834 = vunpack.c.l.b16 %v278
    %v835 = vunpack.c.h.b16 %v278
    %v836 = vunpack.c.l.b16 %v279
    %v837 = vunpack.c.h.b16 %v279
    %v838 = vunpack.c.l.b16 %v280
    %v839 = vunpack.c.h.b16 %v280
    %v840 = vunpack.c.l.b16 %v281
    %v841 = vunpack.c.h.b16 %v281
    %v842 = vunpack.c.l.b16 %v282
    %v843 = vunpack.c.h.b16 %v282
    %v844 = vunpack.c.l.b16 %v283
    %v845 = vunpack.c.h.b16 %v283
    %v846 = vunpack.c.l.b16 %v284
    %v847 = vunpack.c.h.b16 %v284
    %v848 = vunpack.c.l.b16 %v285
    %v849 = vunpack.c.h.b16 %v285
    %v850 = vunpack.c.l.b16 %v286
    %v851 = vunpack.c.h.b16 %v286
    %v852 = vunpack.c.l.b16 %v287
    %v853 = vunpack.c.h.b16 %v287
    %v854 = vunpack.c.l.b16 %v288
    %v855 = vunpack.c.h.b16 %v288
    %v856 = vunpack.c.l.b16 %v289
    %v857 = vunpack.c.h.b16 %v289
    %v858 = vunpack.c.l.b16 %v290
    %v859 = vunpack.c.h.b16 %v290
    %v860 = vunpack.c.l.b16 %v291
    %v861 = vunpack.c.h.b16 %v291
    %v862 = vunpack.c.l.b16 %v292
    %v863 = vunpack.c.h.b16 %v292
    %v864 = vunpack.c.l.b16 %v293
    %v865 = vunpack.c.h.b16 %v293
    %v866 = vunpack.c.l.b16 %v294
    %v867 = vunpack.c.h.b16 %v294
    %v868 = vunpack.c.l.b16 %v295
    %v869 = vunpack.c.h.b16 %v295
    %v870 = vunpack.c.l.b16 %v296
    %v871 = vunpack.c.h.b16 %v296
    %v872 = vunpack.c.l.b16 %v297
    %v873 = vunpack.c.h.b16 %v297
    %v874 = vunpack.c.l.b16 %v298
    %v875 = vunpack.c.h.b16 %v298
    %v876 = vunpack.c.l.b16 %v299
    %v877 = vunpack.c.h.b16 %v299
    %v878 = vunpack.c.l.b16 %v300
    %v879 = vunpack.c.h.b16 %v300
    %v880 = vunpack.c.l.b16 %v301
    %v881 = vunpack.c.h.b16 %v301
    %v882 = vunpack.c.l.b16 %v302
    %v883 = vunpack.c.h.b16 %v302
    %v884 = vunpack.c.l.b16 %v303
    %v885 = vunpack.c.h.b16 %v303
    %v886 = vunpack.c.l.b16 %v304
    %v887 = vunpack.c.h.b16 %v304
    %v888 = vunpack.c.l.b16 %v305
    %v889 = vunpack.c.h.b16 %v305
    %v890 = vunpack.c.l.b16 %v306
    %v891 = vunpack.c.h.b16 %v306
    %v892 = vunpack.c.l.b16 %v307
    %v893 = vunpack.c.h.b16 %v307
    %v894 = vunpack.c.l.b16 %v308
    %v895 = vunpack.c.h.b16 %v308
    %v896 = vunpack.c.l.b16 %v309
    %v897 = vunpack.c.h.b16 %v309
    %v898 = vunpack.c.l.b16 %v310
    %v899 = vunpack.c.h.b16 %v310
    %v900 = vunpack.c.l.b16 %v311
    %v901 = vunpack.c.h.b16 %v311
    %v902 = vunpack.c.l.b16 %v312
    %v903 = vunpack.c.h.b16 %v312
    %v904 = vunpack.c.l.b16 %v313
    %v905 = vunpack.c.h.b16 %v313
    %v906 = vunpack.c.l.b16 %v314
    %v907 = vunpack.c.h.b16 %v314
    %v908 = vunpack.c.l.b16 %v315
    %v909 = vunpack.c.h.b16 %v315
    %v910 = vunpack.c.l.b16 %v316
    %v911 = vunpack.c.h.b16 %v316
    %v912 = vunpack.c.l.b16 %v317
    %v913 = vunpack.c.h.b16 %v317
    %v914 = vunpack.c.l.b16 %v318
    %v915 = vunpack.c.h.b16 %v318
    %v916 = vunpack.c.l.b16 %v319
    %v917 = vunpack.c.h.b16 %v319
    %v918 = vunpack.c.l.b16 %v320
    %v919 = vunpack.c.h.b16 %v320
    %v920 = vunpack.c.l.b16 %v321
    %v921 = vunpack.c.h.b16 %v321
    %v922 = vunpack.c.l.b16 %v322
    %v923 = vunpack.c.h.b16 %v322
    %v924 = vunpack.c.l.b16 %v323
    %v925 = vunpack.c.h.b16 %v323
    %v926 = vunpack.c.l.b16 %v324
    %v927 = vunpack.c.h.b16 %v324
    %v928 = vunpack.c.l.b16 %v325
    %v929 = vunpack.c.h.b16 %v325
    %v930 = vunpack.c.l.b16 %v326
    %v931 = vunpack.c.h.b16 %v326
    %v932 = vunpack.c.l.b16 %v327
    %v933 = vunpack.c.h.b16 %v327
    %v934 = vunpack.c.l.b16 %v328
    %v935 = vunpack.c.h.b16 %v328
    %v936 = vunpack.c.l.b16 %v329
    %v937 = vunpack.c.h.b16 %v329
    %v938 = vunpack.c.l.b16 %v330
    %v939 = vunpack.c.h.b16 %v330
    %v940 = vunpack.c.l.b16 %v331
    %v941 = vunpack.c.h.b16 %v331
    %v942 = vpack.c.b16 %v554, %v550
    %v943 = vpack.c.b16 %v555, %v551
    %v944 = vpack.c.b16 %v556, %v552
    %v945 = vpack.c.b16 %v557, %v553
    %v946 = vpack.c.b16 %v562, %v558
    %v947 = vpack.c.b16 %v563, %v559
    %v948 = vpack.c.b16 %v564, %v560
    %v949 = vpack.c.b16 %v565, %v561
    %v950 = vpack.c.b16 %v570, %v566
    %v951 = vpack.c.b16 %v571, %v567
    %v952 = vpack.c.b16 %v572, %v568
    %v953 = vpack.c.b16 %v573, %v569
    %v954 = vpack.c.b16 %v578, %v574
    %v955 = vpack.c.b16 %v579, %v575
    %v956 = vpack.c.b16 %v580, %v576
    %v957 = vpack.c.b16 %v581, %v577
    %v958 = vpack.c.b16 %v586, %v582
    %v959 = vpack.c.b16 %v587, %v583
    %v960 = vpack.c.b16 %v588, %v584
    %v961 = vpack.c.b16 %v589, %v585
    %v962 = vpack.c.b16 %v594, %v590
    %v963 = vpack.c.b16 %v595, %v591
    %v964 = vpack.c.b16 %v596, %v592
    %v965 = vpack.c.b16 %v597, %v593
    %v966 = vpack.c.b16 %v602, %v598
    %v967 = vpack.c.b16 %v603, %v599
    %v968 = vpack.c.b16 %v604, %v600
    %v969 = vpack.c.b16 %v605, %v601
    %v970 = vpack.c.b16 %v610, %v606
    %v971 = vpack.c.b16 %v611, %v607
    %v972 = vpack.c.b16 %v612, %v608
    %v973 = vpack.c.b16 %v613, %v609
    %v974 = vpack.c.b16 %v618, %v614
    %v975 = vpack.c.b16 %v619, %v615
    %v976 = vpack.c.b16 %v620, %v616
    %v977 = vpack.c.b16 %v621, %v617
    %v978 = vpack.c.b16 %v626, %v622
    %v979 = vpack.c.b16 %v627, %v623
    %v980 = vpack.c.b16 %v628, %v624
    %v981 = vpack.c.b16 %v629, %v625
    %v982 = vpack.c.b16 %v634, %v630
    %v983 = vpack.c.b16 %v635, %v631
    %v984 = vpack.c.b16 %v636, %v632
    %v985 = vpack.c.b16 %v637, %v633
    %v986 = vpack.c.b16 %v642, %v638
    %v987 = vpack.c.b16 %v643, %v639
    %v988 = vpack.c.b16 %v644, %v640
    %v989 = vpack.c.b16 %v645, %v641
    %v990 = vpack.c.b16 %v650, %v646
    %v991 = vpack.c.b16 %v651, %v647
    %v992 = vpack.c.b16 %v652, %v648
    %v993 = vpack.c.b16 %v653, %v649
    %v994 = vpack.c.b16 %v658, %v654
    %v995 = vpack.c.b16 %v659, %v655
    %v996 = vpack.c.b16 %v660, %v656
    %v997 = vpack.c.b16 %v661, %v657
    %v998 = vpack.c.b16 %v666, %v662
    %v999 = vpack.c.b16 %v667, %v663
    %v1000 = vpack.c.b16 %v668, %v664
    %v1001 = vpack.c.b16 %v669, %v665
    %v1002 = vpack.c.b16 %v674, %v670
    %v1003 = vpack.c.b16 %v675, %v671
    %v1004 = vpack.c.b16 %v676, %v672
    %v1005 = vpack.c.b16 %v677, %v673
    %v1006 = vpack.c.b16 %v682, %v678
    %v1007 = vpack.c.b16 %v683, %v679
    %v1008 = vpack.c.b16 %v684, %v680
    %v1009 = vpack.c.b16 %v685, %v681
    %v1010 = vpack.c.b16 %v690, %v686
    %v1011 = vpack.c.b16 %v691, %v687
    %v1012 = vpack.c.b16 %v692, %v688
    %v1013 = vpack.c.b16 %v693, %v689
    %v1014 = vpack.c.b16 %v698, %v694
    %v1015 = vpack.c.b16 %v699, %v695
    %v1016 = vpack.c.b16 %v700, %v696
    %v1017 = vpack.c.b16 %v701, %v697
    %v1018 = vpack.c.b16 %v706, %v702
    %v1019 = vpack.c.b16 %v707, %v703
    %v1020 = vpack.c.b16 %v708, %v704
    %v1021 = vpack.c.b16 %v709, %v705
    %v1022 = vpack.c.b16 %v714, %v710
    %v1023 = vpack.c.b16 %v715, %v711
    %v1024 = vpack.c.b16 %v716, %v712
    %v1025 = vpack.c.b16 %v717, %v713
    %v1026 = vpack.c.b16 %v722, %v718
    %v1027 = vpack.c.b16 %v723, %v719
    %v1028 = vpack.c.b16 %v724, %v720
    %v1029 = vpack.c.b16 %v725, %v721
    %v1030 = vpack.c.b16 %v730, %v726
    %v1031 = vpack.c.b16 %v731, %v727
    %v1032 = vpack.c.b16 %v732, %v728
    %v1033 = vpack.c.b16 %v733, %v729
    %v1034 = vpack.c.b16 %v738, %v734
    %v1035 = vpack.c.b16 %v739, %v735
    %v1036 = vpack.c.b16 %v740, %v736
    %v1037 = vpack.c.b16 %v741, %v737
    %v1038 = vpack.c.b16 %v746, %v742
    %v1039 = vpack.c.b16 %v747, %v743
    %v1040 = vpack.c.b16 %v748, %v744
    %v1041 = vpack.c.b16 %v749, %v745
    %v1042 = vpack.c.b16 %v754, %v750
    %v1043 = vpack.c.b16 %v755, %v751
    %v1044 = vpack.c.b16 %v756, %v752
    %v1045 = vpack.c.b16 %v757, %v753
    %v1046 = vpack.c.b16 %v762, %v758
    %v1047 = vpack.c.b16 %v763, %v759
    %v1048 = vpack.c.b16 %v764, %v760
    %v1049 = vpack.c.b16 %v765, %v761
    %v1050 = vpack.c.b16 %v770, %v766
    %v1051 = vpack.c.b16 %v771, %v767
    %v1052 = vpack.c.b16 %v772, %v768
    %v1053 = vpack.c.b16 %v773, %v769
    %v1054 = vpack.c.b16 %v778, %v774
    %v1055 = vpack.c.b16 %v779, %v775
    %v1056 = vpack.c.b16 %v780, %v776
    %v1057 = vpack.c.b16 %v781, %v777
    %v1058 = vpack.c.b16 %v786, %v782
    %v1059 = vpack.c.b16 %v787, %v783
    %v1060 = vpack.c.b16 %v788, %v784
    %v1061 = vpack.c.b16 %v789, %v785
    %v1062 = vpack.c.b16 %v794, %v790
    %v1063 = vpack.c.b16 %v795, %v791
    %v1064 = vpack.c.b16 %v796, %v792
    %v1065 = vpack.c.b16 %v797, %v793
    %v1066 = vpack.c.b16 %v802, %v798
    %v1067 = vpack.c.b16 %v803, %v799
    %v1068 = vpack.c.b16 %v804, %v800
    %v1069 = vpack.c.b16 %v805, %v801
    %v1070 = vpack.c.b16 %v810, %v806
    %v1071 = vpack.c.b16 %v811, %v807
    %v1072 = vpack.c.b16 %v812, %v808
    %v1073 = vpack.c.b16 %v813, %v809
    %v1074 = vpack.c.b16 %v818, %v814
    %v1075 = vpack.c.b16 %v819, %v815
    %v1076 = vpack.c.b16 %v820, %v816
    %v1077 = vpack.c.b16 %v821, %v817
    %v1078 = vpack.c.b16 %v826, %v822
    %v1079 = vpack.c.b16 %v827, %v823
    %v1080 = vpack.c.b16 %v828, %v824
    %v1081 = vpack.c.b16 %v829, %v825
    %v1082 = vpack.c.b16 %v834, %v830
    %v1083 = vpack.c.b16 %v835, %v831
    %v1084 = vpack.c.b16 %v836, %v832
    %v1085 = vpack.c.b16 %v837, %v833
    %v1086 = vpack.c.b16 %v842, %v838
    %v1087 = vpack.c.b16 %v843, %v839
    %v1088 = vpack.c.b16 %v844, %v840
    %v1089 = vpack.c.b16 %v845, %v841
    %v1090 = vpack.c.b16 %v850, %v846
    %v1091 = vpack.c.b16 %v851, %v847
    %v1092 = vpack.c.b16 %v852, %v848
    %v1093 = vpack.c.b16 %v853, %v849
    %v1094 = vpack.c.b16 %v858, %v854
    %v1095 = vpack.c.b16 %v859, %v855
    %v1096 = vpack.c.b16 %v860, %v856
    %v1097 = vpack.c.b16 %v861, %v857
    %v1098 = vpack.c.b16 %v866, %v862
    %v1099 = vpack.c.b16 %v867, %v863
    %v1100 = vpack.c.b16 %v868, %v864
    %v1101 = vpack.c.b16 %v869, %v865
    %v1102 = vpack.c.b16 %v874, %v870
    %v1103 = vpack.c.b16 %v875, %v871
    %v1104 = vpack.c.b16 %v876, %v872
    %v1105 = vpack.c.b16 %v877, %v873
    %v1106 = vpack.c.b16 %v882, %v878
    %v1107 = vpack.c.b16 %v883, %v879
    %v1108 = vpack.c.b16 %v884, %v880
    %v1109 = vpack.c.b16 %v885, %v881
    %v1110 = vpack.c.b16 %v890, %v886
    %v1111 = vpack.c.b16 %v891, %v887
    %v1112 = vpack.c.b16 %v892, %v888
    %v1113 = vpack.c.b16 %v893, %v889
    %v1114 = vpack.c.b16 %v898, %v894
    %v1115 = vpack.c.b16 %v899, %v895
    %v1116 = vpack.c.b16 %v900, %v896
    %v1117 = vpack.c.b16 %v901, %v897
    %v1118 = vpack.c.b16 %v906, %v902
    %v1119 = vpack.c.b16 %v907, %v903
    %v1120 = vpack.c.b16 %v908, %v904
    %v1121 = vpack.c.b16 %v909, %v905
    %v1122 = vpack.c.b16 %v914, %v910
    %v1123 = vpack.c.b16 %v915, %v911
    %v1124 = vpack.c.b16 %v916, %v912
    %v1125 = vpack.c.b16 %v917, %v913
    %v1126 = vpack.c.b16 %v922, %v918
    %v1127 = vpack.c.b16 %v923, %v919
    %v1128 = vpack.c.b16 %v924, %v920
    %v1129 = vpack.c.b16 %v925, %v921
    %v1130 = vpack.c.b16 %v930, %v926
    %v1131 = vpack.c.b16 %v931, %v927
    %v1132 = vpack.c.b16 %v932, %v928
    %v1133 = vpack.c.b16 %v933, %v929
    %v1134 = vpack.c.b16 %v938, %v934
    %v1135 = vpack.c.b16 %v939, %v935
    %v1136 = vpack.c.b16 %v940, %v936
    %v1137 = vpack.c.b16 %v941, %v937
    %vm1334 = vcmask 130048
    %v1336 = vsel %vm1334, %v135, 0
    %1338 = vmatprep.subr.bf16.mxu0 %v943
    %1339 = vmatpush1.bf16.msra.mxu0 %v942
    %1340 = vmatprep.subr.bf16.mxu0 %v947
    %1341 = vmatpush1.bf16.msra.mxu0 %v946
    %1342 = vmatprep.subr.bf16.mxu0 %v951
    %1343 = vmatpush1.bf16.msra.mxu0 %v950
    %1344 = vmatprep.subr.bf16.mxu0 %v955
    %1345 = vmatpush1.bf16.msra.mxu0 %v954
    %1346 = vmatprep.subr.bf16.mxu0 %v959
    %1347 = vmatpush1.bf16.msra.mxu0 %v958
    %1348 = vmatprep.subr.bf16.mxu0 %v963
    %1349 = vmatpush1.bf16.msra.mxu0 %v962
    %1350 = vmatprep.subr.bf16.mxu0 %v967
    %1351 = vmatpush1.bf16.msra.mxu0 %v966
    %1352 = vmatprep.subr.bf16.mxu0 %v971
    %1353 = vmatpush1.bf16.msra.mxu0 %v970
    %1354 = vmatprep.subr.bf16.mxu0 %v975
    %1355 = vmatpush1.bf16.msra.mxu0 %v974
    %1356 = vmatprep.subr.bf16.mxu0 %v979
    %1357 = vmatpush1.bf16.msra.mxu0 %v978
    %1358 = vmatprep.subr.bf16.mxu0 %v983
    %1359 = vmatpush1.bf16.msra.mxu0 %v982
    %1360 = vmatprep.subr.bf16.mxu0 %v987
    %1361 = vmatpush1.bf16.msra.mxu0 %v986
    %1362 = vmatprep.subr.bf16.mxu0 %v991
    %1363 = vmatpush1.bf16.msra.mxu0 %v990
    %1364 = vmatprep.subr.bf16.mxu0 %v995
    %1365 = vmatpush1.bf16.msra.mxu0 %v994
    %1366 = vmatprep.subr.bf16.mxu0 %v999
    %1367 = vmatpush1.bf16.msra.mxu0 %v998
    %1368 = vmatprep.subr.bf16.mxu0 %v1003
    %1369 = vmatpush1.bf16.msra.mxu0 %v1002
    %1370 = vmatprep.mubr.bf16.mxu0 %v130
    %1371 = vmatmul.mubr.bf16.gmra.mrb[0].mxu0 %v129
    %v1372 = vpop.f32.mrb[0].mxu0
    %v1373 = vadd.f32 %v337, %v1372
    %v1374 = vpop.f32.mrb[0].mxu0
    %v1375 = vadd.f32 %v341, %v1374
    %v1376 = vpop.f32.mrb[0].mxu0
    %v1377 = vadd.f32 %v337, %v1376
    %v1378 = vpop.f32.mrb[0].mxu0
    %v1379 = vadd.f32 %v341, %v1378
    %1380 = vdwg.mxu0
    %1381 = vmatprep.subr.bf16.mxu0 %v1007
    %1382 = vmatpush1.bf16.msra.mxu0 %v1006
    %1383 = vmatprep.subr.bf16.mxu0 %v1011
    %1384 = vmatpush1.bf16.msra.mxu0 %v1010
    %1385 = vmatprep.subr.bf16.mxu0 %v1015
    %1386 = vmatpush1.bf16.msra.mxu0 %v1014
    %1387 = vmatprep.subr.bf16.mxu0 %v1019
    %1388 = vmatpush1.bf16.msra.mxu0 %v1018
    %1389 = vmatprep.subr.bf16.mxu0 %v1023
    %1390 = vmatpush1.bf16.msra.mxu0 %v1022
    %1391 = vmatprep.subr.bf16.mxu0 %v1027
    %1392 = vmatpush1.bf16.msra.mxu0 %v1026
    %1393 = vmatprep.subr.bf16.mxu0 %v1031
    %1394 = vmatpush1.bf16.msra.mxu0 %v1030
    %1395 = vmatprep.subr.bf16.mxu0 %v1035
    %1396 = vmatpush1.bf16.msra.mxu0 %v1034
    %1397 = vmatprep.subr.bf16.mxu0 %v1039
    %1398 = vmatpush1.bf16.msra.mxu0 %v1038
    %1399 = vmatprep.subr.bf16.mxu0 %v1043
    %1400 = vmatpush1.bf16.msra.mxu0 %v1042
    %1401 = vmatprep.subr.bf16.mxu0 %v1047
    %1402 = vmatpush1.bf16.msra.mxu0 %v1046
    %1403 = vmatprep.subr.bf16.mxu0 %v1051
    %1404 = vmatpush1.bf16.msra.mxu0 %v1050
    %1405 = vmatprep.subr.bf16.mxu0 %v1055
    %1406 = vmatpush1.bf16.msra.mxu0 %v1054
    %1407 = vmatprep.subr.bf16.mxu0 %v1059
    %1408 = vmatpush1.bf16.msra.mxu0 %v1058
    %1409 = vmatprep.subr.bf16.mxu0 %v1063
    %1410 = vmatpush1.bf16.msra.mxu0 %v1062
    %1411 = vmatprep.subr.bf16.mxu0 %v1067
    %1412 = vmatpush1.bf16.msra.mxu0 %v1066
    %1413 = vmatprep.mubr.bf16.mxu0 %v132
    %1414 = vmatmul.mubr.bf16.gmra.mrb[0].mxu0 %v131
    %v1415 = vpop.f32.mrb[0].mxu0
    %v1416 = vadd.f32 %v1373, %v1415
    %v1417 = vpop.f32.mrb[0].mxu0
    %v1418 = vadd.f32 %v1375, %v1417
    %v1419 = vpop.f32.mrb[0].mxu0
    %v1420 = vadd.f32 %v1377, %v1419
    %v1421 = vpop.f32.mrb[0].mxu0
    %v1422 = vadd.f32 %v1379, %v1421
    %1423 = vdwg.mxu0
    %1424 = vmatprep.subr.bf16.mxu0 %v1071
    %1425 = vmatpush1.bf16.msra.mxu0 %v1070
    %1426 = vmatprep.subr.bf16.mxu0 %v1075
    %1427 = vmatpush1.bf16.msra.mxu0 %v1074
    %1428 = vmatprep.subr.bf16.mxu0 %v1079
    %1429 = vmatpush1.bf16.msra.mxu0 %v1078
    %1430 = vmatprep.subr.bf16.mxu0 %v1083
    %1431 = vmatpush1.bf16.msra.mxu0 %v1082
    %1432 = vmatprep.subr.bf16.mxu0 %v1087
    %1433 = vmatpush1.bf16.msra.mxu0 %v1086
    %1434 = vmatprep.subr.bf16.mxu0 %v1091
    %1435 = vmatpush1.bf16.msra.mxu0 %v1090
    %1436 = vmatprep.subr.bf16.mxu0 %v1095
    %1437 = vmatpush1.bf16.msra.mxu0 %v1094
    %1438 = vmatprep.subr.bf16.mxu0 %v1099
    %1439 = vmatpush1.bf16.msra.mxu0 %v1098
    %1440 = vmatprep.subr.bf16.mxu0 %v1103
    %1441 = vmatpush1.bf16.msra.mxu0 %v1102
    %1442 = vmatprep.subr.bf16.mxu0 %v1107
    %1443 = vmatpush1.bf16.msra.mxu0 %v1106
    %1444 = vmatprep.subr.bf16.mxu0 %v1111
    %1445 = vmatpush1.bf16.msra.mxu0 %v1110
    %1446 = vmatprep.subr.bf16.mxu0 %v1115
    %1447 = vmatpush1.bf16.msra.mxu0 %v1114
    %1448 = vmatprep.subr.bf16.mxu0 %v1119
    %1449 = vmatpush1.bf16.msra.mxu0 %v1118
    %1450 = vmatprep.subr.bf16.mxu0 %v1123
    %1451 = vmatpush1.bf16.msra.mxu0 %v1122
    %1452 = vmatprep.subr.bf16.mxu0 %v1127
    %1453 = vmatpush1.bf16.msra.mxu0 %v1126
    %1454 = vmatprep.subr.bf16.mxu0 %v1131
    %1455 = vmatpush1.bf16.msra.mxu0 %v1130
    %1456 = vmatprep.mubr.bf16.mxu0 %v134
    %1457 = vmatmul.mubr.bf16.gmra.mrb[0].mxu0 %v133
    %v1458 = vpop.f32.mrb[0].mxu0
    %v1459 = vadd.f32 %v1416, %v1458
    %v1460 = vpop.f32.mrb[0].mxu0
    %v1461 = vadd.f32 %v1418, %v1460
    %v1462 = vpop.f32.mrb[0].mxu0
    %v1463 = vadd.f32 %v1420, %v1462
    %v1464 = vpop.f32.mrb[0].mxu0
    %v1465 = vadd.f32 %v1422, %v1464
    %1466 = vdwg.mxu0
    %1467 = vmatprep.subr.bf16.mxu0 %v1135
    %1468 = vmatpush1.bf16.msra.mxu0 %v1134
    %1469 = vmatprep.subr.bf16.mxu0 0
    %1470 = vmatpush1.bf16.msra.mxu0 0
    %1471 = vmatprep.subr.bf16.mxu0 0
    %1472 = vmatpush1.bf16.msra.mxu0 0
    %1473 = vmatprep.subr.bf16.mxu0 0
    %1474 = vmatpush1.bf16.msra.mxu0 0
    %1475 = vmatprep.subr.bf16.mxu0 0
    %1476 = vmatpush1.bf16.msra.mxu0 0
    %1477 = vmatprep.subr.bf16.mxu0 0
    %1478 = vmatpush1.bf16.msra.mxu0 0
    %1479 = vmatprep.subr.bf16.mxu0 0
    %1480 = vmatpush1.bf16.msra.mxu0 0
    %1481 = vmatprep.subr.bf16.mxu0 0
    %1482 = vmatpush1.bf16.msra.mxu0 0
    %1483 = vmatprep.subr.bf16.mxu0 0
    %1484 = vmatpush1.bf16.msra.mxu0 0
    %1485 = vmatprep.subr.bf16.mxu0 0
    %1486 = vmatpush1.bf16.msra.mxu0 0
    %1487 = vmatprep.subr.bf16.mxu0 0
    %1488 = vmatpush1.bf16.msra.mxu0 0
    %1489 = vmatprep.subr.bf16.mxu0 0
    %1490 = vmatpush1.bf16.msra.mxu0 0
    %1491 = vmatprep.subr.bf16.mxu0 0
    %1492 = vmatpush1.bf16.msra.mxu0 0
    %1493 = vmatprep.subr.bf16.mxu0 0
    %1494 = vmatpush1.bf16.msra.mxu0 0
    %1495 = vmatprep.subr.bf16.mxu0 0
    %1496 = vmatpush1.bf16.msra.mxu0 0
    %1497 = vmatprep.subr.bf16.mxu0 0
    %1498 = vmatpush1.bf16.msra.mxu0 0
    %1499 = vmatprep.mubr.bf16.mxu0 0
    %1500 = vmatmul.mubr.bf16.gmra.mrb[0].mxu0 %v1336
    %v1501 = vpop.f32.mrb[0].mxu0
    %v1502 = vadd.f32 %v1459, %v1501
    %v1503 = vpop.f32.mrb[0].mxu0
    %v1504 = vadd.f32 %v1461, %v1503
    %v1505 = vpop.f32.mrb[0].mxu0
    %v1506 = vadd.f32 %v1463, %v1505
    %v1507 = vpop.f32.mrb[0].mxu0
    %v1508 = vadd.f32 %v1465, %v1507
    %1509 = vdwg.mxu0
    %1510 = vmatprep.subr.bf16.mxu0 %v945
    %1511 = vmatpush1.bf16.msra.mxu0 %v944
    %1512 = vmatprep.subr.bf16.mxu0 %v949
    %1513 = vmatpush1.bf16.msra.mxu0 %v948
    %1514 = vmatprep.subr.bf16.mxu0 %v953
    %1515 = vmatpush1.bf16.msra.mxu0 %v952
    %1516 = vmatprep.subr.bf16.mxu0 %v957
    %1517 = vmatpush1.bf16.msra.mxu0 %v956
    %1518 = vmatprep.subr.bf16.mxu0 %v961
    %1519 = vmatpush1.bf16.msra.mxu0 %v960
    %1520 = vmatprep.subr.bf16.mxu0 %v965
    %1521 = vmatpush1.bf16.msra.mxu0 %v964
    %1522 = vmatprep.subr.bf16.mxu0 %v969
    %1523 = vmatpush1.bf16.msra.mxu0 %v968
    %1524 = vmatprep.subr.bf16.mxu0 %v973
    %1525 = vmatpush1.bf16.msra.mxu0 %v972
    %1526 = vmatprep.subr.bf16.mxu0 %v977
    %1527 = vmatpush1.bf16.msra.mxu0 %v976
    %1528 = vmatprep.subr.bf16.mxu0 %v981
    %1529 = vmatpush1.bf16.msra.mxu0 %v980
    %1530 = vmatprep.subr.bf16.mxu0 %v985
    %1531 = vmatpush1.bf16.msra.mxu0 %v984
    %1532 = vmatprep.subr.bf16.mxu0 %v989
    %1533 = vmatpush1.bf16.msra.mxu0 %v988
    %1534 = vmatprep.subr.bf16.mxu0 %v993
    %1535 = vmatpush1.bf16.msra.mxu0 %v992
    %1536 = vmatprep.subr.bf16.mxu0 %v997
    %1537 = vmatpush1.bf16.msra.mxu0 %v996
    %1538 = vmatprep.subr.bf16.mxu0 %v1001
    %1539 = vmatpush1.bf16.msra.mxu0 %v1000
    %1540 = vmatprep.subr.bf16.mxu0 %v1005
    %1541 = vmatpush1.bf16.msra.mxu0 %v1004
    %1542 = vmatprep.mubr.bf16.mxu0 %v130
    %1543 = vmatmul.mubr.bf16.gmra.mrb[0].mxu0 %v129
    %v1544 = vpop.f32.mrb[0].mxu0
    %v1545 = vadd.f32 %v345, %v1544
    %v1546 = vpop.f32.mrb[0].mxu0
    %v1547 = vadd.f32 %v349, %v1546
    %v1548 = vpop.f32.mrb[0].mxu0
    %v1549 = vadd.f32 %v345, %v1548
    %v1550 = vpop.f32.mrb[0].mxu0
    %v1551 = vadd.f32 %v349, %v1550
    %1552 = vdwg.mxu0
    %1553 = vmatprep.subr.bf16.mxu0 %v1009
    %1554 = vmatpush1.bf16.msra.mxu0 %v1008
    %1555 = vmatprep.subr.bf16.mxu0 %v1013
    %1556 = vmatpush1.bf16.msra.mxu0 %v1012
    %1557 = vmatprep.subr.bf16.mxu0 %v1017
    %1558 = vmatpush1.bf16.msra.mxu0 %v1016
    %1559 = vmatprep.subr.bf16.mxu0 %v1021
    %1560 = vmatpush1.bf16.msra.mxu0 %v1020
    %1561 = vmatprep.subr.bf16.mxu0 %v1025
    %1562 = vmatpush1.bf16.msra.mxu0 %v1024
    %1563 = vmatprep.subr.bf16.mxu0 %v1029
    %1564 = vmatpush1.bf16.msra.mxu0 %v1028
    %1565 = vmatprep.subr.bf16.mxu0 %v1033
    %1566 = vmatpush1.bf16.msra.mxu0 %v1032
    %1567 = vmatprep.subr.bf16.mxu0 %v1037
    %1568 = vmatpush1.bf16.msra.mxu0 %v1036
    %1569 = vmatprep.subr.bf16.mxu0 %v1041
    %1570 = vmatpush1.bf16.msra.mxu0 %v1040
    %1571 = vmatprep.subr.bf16.mxu0 %v1045
    %1572 = vmatpush1.bf16.msra.mxu0 %v1044
    %1573 = vmatprep.subr.bf16.mxu0 %v1049
    %1574 = vmatpush1.bf16.msra.mxu0 %v1048
    %1575 = vmatprep.subr.bf16.mxu0 %v1053
    %1576 = vmatpush1.bf16.msra.mxu0 %v1052
    %1577 = vmatprep.subr.bf16.mxu0 %v1057
    %1578 = vmatpush1.bf16.msra.mxu0 %v1056
    %1579 = vmatprep.subr.bf16.mxu0 %v1061
    %1580 = vmatpush1.bf16.msra.mxu0 %v1060
    %1581 = vmatprep.subr.bf16.mxu0 %v1065
    %1582 = vmatpush1.bf16.msra.mxu0 %v1064
    %1583 = vmatprep.subr.bf16.mxu0 %v1069
    %1584 = vmatpush1.bf16.msra.mxu0 %v1068
    %1585 = vmatprep.mubr.bf16.mxu0 %v132
    %1586 = vmatmul.mubr.bf16.gmra.mrb[0].mxu0 %v131
    %v1587 = vpop.f32.mrb[0].mxu0
    %v1588 = vadd.f32 %v1545, %v1587
    %v1589 = vpop.f32.mrb[0].mxu0
    %v1590 = vadd.f32 %v1547, %v1589
    %v1591 = vpop.f32.mrb[0].mxu0
    %v1592 = vadd.f32 %v1549, %v1591
    %v1593 = vpop.f32.mrb[0].mxu0
    %v1594 = vadd.f32 %v1551, %v1593
    %1595 = vdwg.mxu0
    %1596 = vmatprep.subr.bf16.mxu0 %v1073
    %1597 = vmatpush1.bf16.msra.mxu0 %v1072
    %1598 = vmatprep.subr.bf16.mxu0 %v1077
    %1599 = vmatpush1.bf16.msra.mxu0 %v1076
    %1600 = vmatprep.subr.bf16.mxu0 %v1081
    %1601 = vmatpush1.bf16.msra.mxu0 %v1080
    %1602 = vmatprep.subr.bf16.mxu0 %v1085
    %1603 = vmatpush1.bf16.msra.mxu0 %v1084
    %1604 = vmatprep.subr.bf16.mxu0 %v1089
    %1605 = vmatpush1.bf16.msra.mxu0 %v1088
    %1606 = vmatprep.subr.bf16.mxu0 %v1093
    %1607 = vmatpush1.bf16.msra.mxu0 %v1092
    %1608 = vmatprep.subr.bf16.mxu0 %v1097
    %1609 = vmatpush1.bf16.msra.mxu0 %v1096
    %1610 = vmatprep.subr.bf16.mxu0 %v1101
    %1611 = vmatpush1.bf16.msra.mxu0 %v1100
    %1612 = vmatprep.subr.bf16.mxu0 %v1105
    %1613 = vmatpush1.bf16.msra.mxu0 %v1104
    %1614 = vmatprep.subr.bf16.mxu0 %v1109
    %1615 = vmatpush1.bf16.msra.mxu0 %v1108
    %1616 = vmatprep.subr.bf16.mxu0 %v1113
    %1617 = vmatpush1.bf16.msra.mxu0 %v1112
    %1618 = vmatprep.subr.bf16.mxu0 %v1117
    %1619 = vmatpush1.bf16.msra.mxu0 %v1116
    %1620 = vmatprep.subr.bf16.mxu0 %v1121
    %1621 = vmatpush1.bf16.msra.mxu0 %v1120
    %1622 = vmatprep.subr.bf16.mxu0 %v1125
    %1623 = vmatpush1.bf16.msra.mxu0 %v1124
    %1624 = vmatprep.subr.bf16.mxu0 %v1129
    %1625 = vmatpush1.bf16.msra.mxu0 %v1128
    %1626 = vmatprep.subr.bf16.mxu0 %v1133
    %1627 = vmatpush1.bf16.msra.mxu0 %v1132
    %1628 = vmatprep.mubr.bf16.mxu0 %v134
    %1629 = vmatmul.mubr.bf16.gmra.mrb[0].mxu0 %v133
    %v1630 = vpop.f32.mrb[0].mxu0
    %v1631 = vadd.f32 %v1588, %v1630
    %v1632 = vpop.f32.mrb[0].mxu0
    %v1633 = vadd.f32 %v1590, %v1632
    %v1634 = vpop.f32.mrb[0].mxu0
    %v1635 = vadd.f32 %v1592, %v1634
    %v1636 = vpop.f32.mrb[0].mxu0
    %v1637 = vadd.f32 %v1594, %v1636
    %1638 = vdwg.mxu0
    %1639 = vmatprep.subr.bf16.mxu0 %v1137
    %1640 = vmatpush1.bf16.msra.mxu0 %v1136
    %1641 = vmatprep.subr.bf16.mxu0 0
    %1642 = vmatpush1.bf16.msra.mxu0 0
    %1643 = vmatprep.subr.bf16.mxu0 0
    %1644 = vmatpush1.bf16.msra.mxu0 0
    %1645 = vmatprep.subr.bf16.mxu0 0
    %1646 = vmatpush1.bf16.msra.mxu0 0
    %1647 = vmatprep.subr.bf16.mxu0 0
    %1648 = vmatpush1.bf16.msra.mxu0 0
    %1649 = vmatprep.subr.bf16.mxu0 0
    %1650 = vmatpush1.bf16.msra.mxu0 0
    %1651 = vmatprep.subr.bf16.mxu0 0
    %1652 = vmatpush1.bf16.msra.mxu0 0
    %1653 = vmatprep.subr.bf16.mxu0 0
    %1654 = vmatpush1.bf16.msra.mxu0 0
    %1655 = vmatprep.subr.bf16.mxu0 0
    %1656 = vmatpush1.bf16.msra.mxu0 0
    %1657 = vmatprep.subr.bf16.mxu0 0
    %1658 = vmatpush1.bf16.msra.mxu0 0
    %1659 = vmatprep.subr.bf16.mxu0 0
    %1660 = vmatpush1.bf16.msra.mxu0 0
    %1661 = vmatprep.subr.bf16.mxu0 0
    %1662 = vmatpush1.bf16.msra.mxu0 0
    %1663 = vmatprep.subr.bf16.mxu0 0
    %1664 = vmatpush1.bf16.msra.mxu0 0
    %1665 = vmatprep.subr.bf16.mxu0 0
    %1666 = vmatpush1.bf16.msra.mxu0 0
    %1667 = vmatprep.subr.bf16.mxu0 0
    %1668 = vmatpush1.bf16.msra.mxu0 0
    %1669 = vmatprep.subr.bf16.mxu0 0
    %1670 = vmatpush1.bf16.msra.mxu0 0
    %1671 = vmatprep.mubr.bf16.mxu0 0
    %1672 = vmatmul.mubr.bf16.gmra.mrb[0].mxu0 %v1336
    %v1673 = vpop.f32.mrb[0].mxu0
    %v1674 = vadd.f32 %v1631, %v1673
    %v1675 = vpop.f32.mrb[0].mxu0
    %v1676 = vadd.f32 %v1633, %v1675
    %v1677 = vpop.f32.mrb[0].mxu0
    %v1678 = vadd.f32 %v1635, %v1677
    %v1679 = vpop.f32.mrb[0].mxu0
    %v1680 = vadd.f32 %v1637, %v1679
    %1681 = vdwg.mxu0
    %vm1682 = vcmp.gt.f32.partialorder %v1502, 0.0
    %vm1683 = vcmp.gt.f32.partialorder %v1504, 0.0
    %vm1684 = vcmp.gt.f32.partialorder %v1674, 0.0
    %vm1685 = vcmp.gt.f32.partialorder %v1676, 0.0
    %vm1686 = vcmp.gt.f32.partialorder %v1506, 0.0
    %vm1687 = vcmp.gt.f32.partialorder %v1508, 0.0
    %vm1688 = vcmp.gt.f32.partialorder %v1678, 0.0
    %vm1689 = vcmp.gt.f32.partialorder %v1680, 0.0
    %v1690 = vmul.f32 %v1502, 0.2
    %v1691 = vmul.f32 %v1504, 0.2
    %v1692 = vmul.f32 %v1674, 0.2
    %v1693 = vmul.f32 %v1676, 0.2
    %v1694 = vmul.f32 %v1506, 0.2
    %v1695 = vmul.f32 %v1508, 0.2
    %v1696 = vmul.f32 %v1678, 0.2
    %v1697 = vmul.f32 %v1680, 0.2
    %v1698 = vsel %vm1682, %v1502, %v1690
    %v1699 = vsel %vm1683, %v1504, %v1691
    %v1700 = vsel %vm1684, %v1674, %v1692
    %v1701 = vsel %vm1685, %v1676, %v1693
    %v1702 = vsel %vm1686, %v1506, %v1694
    %v1703 = vsel %vm1687, %v1508, %v1695
    %v1704 = vsel %vm1688, %v1678, %v1696
    %v1705 = vsel %vm1689, %v1680, %v1697
    %v1706 = vpack.c.bf16 %v1702, %v1698
    %v1707 = vpack.c.bf16 %v1703, %v1699
    %v1708 = vpack.c.bf16 %v1704, %v1700
    %v1709 = vpack.c.bf16 %v1705, %v1701
    %v1710 = vld [vmem:[#allocation7] sm:$0xff]
    %v1711 = vld [vmem:[#allocation7 + $0x8] sm:$0xff]
    %v1712 = vld [vmem:[#allocation7 + $0x10] sm:$0xff]
    %v1713 = vld [vmem:[#allocation7 + $0x18] sm:$0xff]
    %v1714 = vld [vmem:[#allocation7 + $0x20] sm:$0xff]
    %v1715 = vld [vmem:[#allocation7 + $0x28] sm:$0xff]
    %v1716 = vld [vmem:[#allocation7 + $0x30] sm:$0xff]
    %v1717 = vld [vmem:[#allocation7 + $0x38] sm:$0xff]
    %v1718 = vld [vmem:[#allocation7 + $0x40] sm:$0xff]
    %v1719 = vld [vmem:[#allocation7 + $0x48] sm:$0xff]
    %v1720 = vld [vmem:[#allocation7 + $0x50] sm:$0xff]
    %v1721 = vld [vmem:[#allocation7 + $0x58] sm:$0xff]
    %v1722 = vld [vmem:[#allocation7 + $0x60] sm:$0xff]
    %v1723 = vld [vmem:[#allocation7 + $0x68] sm:$0xff]
    %v1724 = vld [vmem:[#allocation7 + $0x70] sm:$0xff]
    %v1725 = vld [vmem:[#allocation7 + $0x78] sm:$0xff]
    %v1726 = vld [vmem:[#allocation7 + $0x80] sm:$0xff]
    %v1727 = vld [vmem:[#allocation7 + $0x88] sm:$0xff]
    %v1728 = vld [vmem:[#allocation7 + $0x90] sm:$0xff]
    %v1729 = vld [vmem:[#allocation7 + $0x98] sm:$0xff]
    %v1730 = vld [vmem:[#allocation7 + $0xa0] sm:$0xff]
    %v1731 = vld [vmem:[#allocation7 + $0xa8] sm:$0xff]
    %v1732 = vld [vmem:[#allocation7 + $0xb0] sm:$0xff]
    %v1733 = vld [vmem:[#allocation7 + $0xb8] sm:$0xff]
    %v1734 = vld [vmem:[#allocation7 + $0xc0] sm:$0xff]
    %v1735 = vld [vmem:[#allocation7 + $0xc8] sm:$0xff]
    %v1736 = vld [vmem:[#allocation7 + $0xd0] sm:$0xff]
    %v1737 = vld [vmem:[#allocation7 + $0xd8] sm:$0xff]
    %v1738 = vld [vmem:[#allocation7 + $0xe0] sm:$0xff]
    %v1739 = vld [vmem:[#allocation7 + $0xe8] sm:$0xff]
    %v1740 = vld [vmem:[#allocation7 + $0xf0] sm:$0xff]
    %v1741 = vld [vmem:[#allocation7 + $0xf8] sm:$0xff]
    %v1742 = vld [vmem:[#allocation7 + $0x100] sm:$0xff]
    %v1743 = vld [vmem:[#allocation7 + $0x108] sm:$0xff]
    %v1744 = vld [vmem:[#allocation7 + $0x110] sm:$0xff]
    %v1745 = vld [vmem:[#allocation7 + $0x118] sm:$0xff]
    %v1746 = vld [vmem:[#allocation7 + $0x120] sm:$0xff]
    %v1747 = vld [vmem:[#allocation7 + $0x128] sm:$0xff]
    %v1748 = vld [vmem:[#allocation7 + $0x130] sm:$0xff]
    %v1749 = vld [vmem:[#allocation7 + $0x138] sm:$0xff]
    %v1750 = vld [vmem:[#allocation7 + $0x140] sm:$0xff]
    %v1751 = vld [vmem:[#allocation7 + $0x148] sm:$0xff]
    %v1752 = vld [vmem:[#allocation7 + $0x150] sm:$0xff]
    %v1753 = vld [vmem:[#allocation7 + $0x158] sm:$0xff]
    %v1754 = vld [vmem:[#allocation7 + $0x160] sm:$0xff]
    %v1755 = vld [vmem:[#allocation7 + $0x168] sm:$0xff]
    %v1756 = vld [vmem:[#allocation7 + $0x170] sm:$0xff]
    %v1757 = vld [vmem:[#allocation7 + $0x178] sm:$0xff]
    %v1758 = vld [vmem:[#allocation7 + $0x180] sm:$0xff]
    %v1759 = vld [vmem:[#allocation7 + $0x188] sm:$0xff]
    %v1760 = vld [vmem:[#allocation7 + $0x190] sm:$0xff]
    %v1761 = vld [vmem:[#allocation7 + $0x198] sm:$0xff]
    %v1762 = vld [vmem:[#allocation7 + $0x1a0] sm:$0xff]
    %v1763 = vld [vmem:[#allocation7 + $0x1a8] sm:$0xff]
    %v1764 = vld [vmem:[#allocation7 + $0x1b0] sm:$0xff]
    %v1765 = vld [vmem:[#allocation7 + $0x1b8] sm:$0xff]
    %v1766 = vld [vmem:[#allocation7 + $0x1c0] sm:$0xff]
    %v1767 = vld [vmem:[#allocation7 + $0x1c8] sm:$0xff]
    %v1768 = vld [vmem:[#allocation7 + $0x1d0] sm:$0xff]
    %v1769 = vld [vmem:[#allocation7 + $0x1d8] sm:$0xff]
    %v1770 = vld [vmem:[#allocation7 + $0x1e0] sm:$0xff]
    %v1771 = vld [vmem:[#allocation7 + $0x1e8] sm:$0xff]
    %v1772 = vld [vmem:[#allocation7 + $0x1f0] sm:$0xff]
    %v1773 = vld [vmem:[#allocation7 + $0x1f8] sm:$0xff]
    %v1774 = vld [vmem:[%s4] sm:$0x3]
    %v1776 = vlaneseq
    %v1777 = vshrl.u32 %v1776, 7
    %v1778 = vsub.s32 0, %v1777
    %v1779 = vrot.slane %v1774, %v1778
    %v1780 = vlaneseq
    %v1781 = vshrl.u32 %v1780, 7
    %v1782 = vsub.s32 1, %v1781
    %v1783 = vrot.slane %v1774, %v1782
    %v1850 = vunpack.c.l.b16 %v1710
    %v1851 = vunpack.c.h.b16 %v1710
    %v1852 = vunpack.c.l.b16 %v1711
    %v1853 = vunpack.c.h.b16 %v1711
    %v1854 = vunpack.c.l.b16 %v1712
    %v1855 = vunpack.c.h.b16 %v1712
    %v1856 = vunpack.c.l.b16 %v1713
    %v1857 = vunpack.c.h.b16 %v1713
    %v1858 = vunpack.c.l.b16 %v1714
    %v1859 = vunpack.c.h.b16 %v1714
    %v1860 = vunpack.c.l.b16 %v1715
    %v1861 = vunpack.c.h.b16 %v1715
    %v1862 = vunpack.c.l.b16 %v1716
    %v1863 = vunpack.c.h.b16 %v1716
    %v1864 = vunpack.c.l.b16 %v1717
    %v1865 = vunpack.c.h.b16 %v1717
    %v1866 = vunpack.c.l.b16 %v1718
    %v1867 = vunpack.c.h.b16 %v1718
    %v1868 = vunpack.c.l.b16 %v1719
    %v1869 = vunpack.c.h.b16 %v1719
    %v1870 = vunpack.c.l.b16 %v1720
    %v1871 = vunpack.c.h.b16 %v1720
    %v1872 = vunpack.c.l.b16 %v1721
    %v1873 = vunpack.c.h.b16 %v1721
    %v1874 = vunpack.c.l.b16 %v1722
    %v1875 = vunpack.c.h.b16 %v1722
    %v1876 = vunpack.c.l.b16 %v1723
    %v1877 = vunpack.c.h.b16 %v1723
    %v1878 = vunpack.c.l.b16 %v1724
    %v1879 = vunpack.c.h.b16 %v1724
    %v1880 = vunpack.c.l.b16 %v1725
    %v1881 = vunpack.c.h.b16 %v1725
    %v1882 = vunpack.c.l.b16 %v1726
    %v1883 = vunpack.c.h.b16 %v1726
    %v1884 = vunpack.c.l.b16 %v1727
    %v1885 = vunpack.c.h.b16 %v1727
    %v1886 = vunpack.c.l.b16 %v1728
    %v1887 = vunpack.c.h.b16 %v1728
    %v1888 = vunpack.c.l.b16 %v1729
    %v1889 = vunpack.c.h.b16 %v1729
    %v1890 = vunpack.c.l.b16 %v1730
    %v1891 = vunpack.c.h.b16 %v1730
    %v1892 = vunpack.c.l.b16 %v1731
    %v1893 = vunpack.c.h.b16 %v1731
    %v1894 = vunpack.c.l.b16 %v1732
    %v1895 = vunpack.c.h.b16 %v1732
    %v1896 = vunpack.c.l.b16 %v1733
    %v1897 = vunpack.c.h.b16 %v1733
    %v1898 = vunpack.c.l.b16 %v1734
    %v1899 = vunpack.c.h.b16 %v1734
    %v1900 = vunpack.c.l.b16 %v1735
    %v1901 = vunpack.c.h.b16 %v1735
    %v1902 = vunpack.c.l.b16 %v1736
    %v1903 = vunpack.c.h.b16 %v1736
    %v1904 = vunpack.c.l.b16 %v1737
    %v1905 = vunpack.c.h.b16 %v1737
    %v1906 = vunpack.c.l.b16 %v1738
    %v1907 = vunpack.c.h.b16 %v1738
    %v1908 = vunpack.c.l.b16 %v1739
    %v1909 = vunpack.c.h.b16 %v1739
    %v1910 = vunpack.c.l.b16 %v1740
    %v1911 = vunpack.c.h.b16 %v1740
    %v1912 = vunpack.c.l.b16 %v1741
    %v1913 = vunpack.c.h.b16 %v1741
    %v1914 = vunpack.c.l.b16 %v1742
    %v1915 = vunpack.c.h.b16 %v1742
    %v1916 = vunpack.c.l.b16 %v1743
    %v1917 = vunpack.c.h.b16 %v1743
    %v1918 = vunpack.c.l.b16 %v1744
    %v1919 = vunpack.c.h.b16 %v1744
    %v1920 = vunpack.c.l.b16 %v1745
    %v1921 = vunpack.c.h.b16 %v1745
    %v1922 = vunpack.c.l.b16 %v1746
    %v1923 = vunpack.c.h.b16 %v1746
    %v1924 = vunpack.c.l.b16 %v1747
    %v1925 = vunpack.c.h.b16 %v1747
    %v1926 = vunpack.c.l.b16 %v1748
    %v1927 = vunpack.c.h.b16 %v1748
    %v1928 = vunpack.c.l.b16 %v1749
    %v1929 = vunpack.c.h.b16 %v1749
    %v1930 = vunpack.c.l.b16 %v1750
    %v1931 = vunpack.c.h.b16 %v1750
    %v1932 = vunpack.c.l.b16 %v1751
    %v1933 = vunpack.c.h.b16 %v1751
    %v1934 = vunpack.c.l.b16 %v1752
    %v1935 = vunpack.c.h.b16 %v1752
    %v1936 = vunpack.c.l.b16 %v1753
    %v1937 = vunpack.c.h.b16 %v1753
    %v1938 = vunpack.c.l.b16 %v1754
    %v1939 = vunpack.c.h.b16 %v1754
    %v1940 = vunpack.c.l.b16 %v1755
    %v1941 = vunpack.c.h.b16 %v1755
    %v1942 = vunpack.c.l.b16 %v1756
    %v1943 = vunpack.c.h.b16 %v1756
    %v1944 = vunpack.c.l.b16 %v1757
    %v1945 = vunpack.c.h.b16 %v1757
    %v1946 = vunpack.c.l.b16 %v1758
    %v1947 = vunpack.c.h.b16 %v1758
    %v1948 = vunpack.c.l.b16 %v1759
    %v1949 = vunpack.c.h.b16 %v1759
    %v1950 = vunpack.c.l.b16 %v1760
    %v1951 = vunpack.c.h.b16 %v1760
    %v1952 = vunpack.c.l.b16 %v1761
    %v1953 = vunpack.c.h.b16 %v1761
    %v1954 = vunpack.c.l.b16 %v1762
    %v1955 = vunpack.c.h.b16 %v1762
    %v1956 = vunpack.c.l.b16 %v1763
    %v1957 = vunpack.c.h.b16 %v1763
    %v1958 = vunpack.c.l.b16 %v1764
    %v1959 = vunpack.c.h.b16 %v1764
    %v1960 = vunpack.c.l.b16 %v1765
    %v1961 = vunpack.c.h.b16 %v1765
    %v1962 = vunpack.c.l.b16 %v1766
    %v1963 = vunpack.c.h.b16 %v1766
    %v1964 = vunpack.c.l.b16 %v1767
    %v1965 = vunpack.c.h.b16 %v1767
    %v1966 = vunpack.c.l.b16 %v1768
    %v1967 = vunpack.c.h.b16 %v1768
    %v1968 = vunpack.c.l.b16 %v1769
    %v1969 = vunpack.c.h.b16 %v1769
    %v1970 = vunpack.c.l.b16 %v1770
    %v1971 = vunpack.c.h.b16 %v1770
    %v1972 = vunpack.c.l.b16 %v1771
    %v1973 = vunpack.c.h.b16 %v1771
    %v1974 = vunpack.c.l.b16 %v1772
    %v1975 = vunpack.c.h.b16 %v1772
    %v1976 = vunpack.c.l.b16 %v1773
    %v1977 = vunpack.c.h.b16 %v1773
    %v1978 = vpack.c.b16 %v1852, %v1850
    %v1979 = vpack.c.b16 %v1853, %v1851
    %v1980 = vpack.c.b16 %v1856, %v1854
    %v1981 = vpack.c.b16 %v1857, %v1855
    %v1982 = vpack.c.b16 %v1860, %v1858
    %v1983 = vpack.c.b16 %v1861, %v1859
    %v1984 = vpack.c.b16 %v1864, %v1862
    %v1985 = vpack.c.b16 %v1865, %v1863
    %v1986 = vpack.c.b16 %v1868, %v1866
    %v1987 = vpack.c.b16 %v1869, %v1867
    %v1988 = vpack.c.b16 %v1872, %v1870
    %v1989 = vpack.c.b16 %v1873, %v1871
    %v1990 = vpack.c.b16 %v1876, %v1874
    %v1991 = vpack.c.b16 %v1877, %v1875
    %v1992 = vpack.c.b16 %v1880, %v1878
    %v1993 = vpack.c.b16 %v1881, %v1879
    %v1994 = vpack.c.b16 %v1884, %v1882
    %v1995 = vpack.c.b16 %v1885, %v1883
    %v1996 = vpack.c.b16 %v1888, %v1886
    %v1997 = vpack.c.b16 %v1889, %v1887
    %v1998 = vpack.c.b16 %v1892, %v1890
    %v1999 = vpack.c.b16 %v1893, %v1891
    %v2000 = vpack.c.b16 %v1896, %v1894
    %v2001 = vpack.c.b16 %v1897, %v1895
    %v2002 = vpack.c.b16 %v1900, %v1898
    %v2003 = vpack.c.b16 %v1901, %v1899
    %v2004 = vpack.c.b16 %v1904, %v1902
    %v2005 = vpack.c.b16 %v1905, %v1903
    %v2006 = vpack.c.b16 %v1908, %v1906
    %v2007 = vpack.c.b16 %v1909, %v1907
    %v2008 = vpack.c.b16 %v1912, %v1910
    %v2009 = vpack.c.b16 %v1913, %v1911
    %v2010 = vpack.c.b16 %v1916, %v1914
    %v2011 = vpack.c.b16 %v1917, %v1915
    %v2012 = vpack.c.b16 %v1920, %v1918
    %v2013 = vpack.c.b16 %v1921, %v1919
    %v2014 = vpack.c.b16 %v1924, %v1922
    %v2015 = vpack.c.b16 %v1925, %v1923
    %v2016 = vpack.c.b16 %v1928, %v1926
    %v2017 = vpack.c.b16 %v1929, %v1927
    %v2018 = vpack.c.b16 %v1932, %v1930
    %v2019 = vpack.c.b16 %v1933, %v1931
    %v2020 = vpack.c.b16 %v1936, %v1934
    %v2021 = vpack.c.b16 %v1937, %v1935
    %v2022 = vpack.c.b16 %v1940, %v1938
    %v2023 = vpack.c.b16 %v1941, %v1939
    %v2024 = vpack.c.b16 %v1944, %v1942
    %v2025 = vpack.c.b16 %v1945, %v1943
    %v2026 = vpack.c.b16 %v1948, %v1946
    %v2027 = vpack.c.b16 %v1949, %v1947
    %v2028 = vpack.c.b16 %v1952, %v1950
    %v2029 = vpack.c.b16 %v1953, %v1951
    %v2030 = vpack.c.b16 %v1956, %v1954
    %v2031 = vpack.c.b16 %v1957, %v1955
    %v2032 = vpack.c.b16 %v1960, %v1958
    %v2033 = vpack.c.b16 %v1961, %v1959
    %v2034 = vpack.c.b16 %v1964, %v1962
    %v2035 = vpack.c.b16 %v1965, %v1963
    %v2036 = vpack.c.b16 %v1968, %v1966
    %v2037 = vpack.c.b16 %v1969, %v1967
    %v2038 = vpack.c.b16 %v1972, %v1970
    %v2039 = vpack.c.b16 %v1973, %v1971
    %v2040 = vpack.c.b16 %v1976, %v1974
    %v2041 = vpack.c.b16 %v1977, %v1975
    %2106 = vmatprep.subr.bf16.mxu0 %v1979
    %2107 = vmatpush1.bf16.msra.mxu0 %v1978
    %2108 = vmatprep.subr.bf16.mxu0 %v1981
    %2109 = vmatpush1.bf16.msra.mxu0 %v1980
    %2110 = vmatprep.subr.bf16.mxu0 %v1983
    %2111 = vmatpush1.bf16.msra.mxu0 %v1982
    %2112 = vmatprep.subr.bf16.mxu0 %v1985
    %2113 = vmatpush1.bf16.msra.mxu0 %v1984
    %2114 = vmatprep.subr.bf16.mxu0 %v1987
    %2115 = vmatpush1.bf16.msra.mxu0 %v1986
    %2116 = vmatprep.subr.bf16.mxu0 %v1989
    %2117 = vmatpush1.bf16.msra.mxu0 %v1988
    %2118 = vmatprep.subr.bf16.mxu0 %v1991
    %2119 = vmatpush1.bf16.msra.mxu0 %v1990
    %2120 = vmatprep.subr.bf16.mxu0 %v1993
    %2121 = vmatpush1.bf16.msra.mxu0 %v1992
    %2122 = vmatprep.subr.bf16.mxu0 %v1995
    %2123 = vmatpush1.bf16.msra.mxu0 %v1994
    %2124 = vmatprep.subr.bf16.mxu0 %v1997
    %2125 = vmatpush1.bf16.msra.mxu0 %v1996
    %2126 = vmatprep.subr.bf16.mxu0 %v1999
    %2127 = vmatpush1.bf16.msra.mxu0 %v1998
    %2128 = vmatprep.subr.bf16.mxu0 %v2001
    %2129 = vmatpush1.bf16.msra.mxu0 %v2000
    %2130 = vmatprep.subr.bf16.mxu0 %v2003
    %2131 = vmatpush1.bf16.msra.mxu0 %v2002
    %2132 = vmatprep.subr.bf16.mxu0 %v2005
    %2133 = vmatpush1.bf16.msra.mxu0 %v2004
    %2134 = vmatprep.subr.bf16.mxu0 %v2007
    %2135 = vmatpush1.bf16.msra.mxu0 %v2006
    %2136 = vmatprep.subr.bf16.mxu0 %v2009
    %2137 = vmatpush1.bf16.msra.mxu0 %v2008
    %2138 = vmatprep.mubr.bf16.mxu0 %v1707
    %2139 = vmatmul.mubr.bf16.gmra.mrb[0].mxu0 %v1706
    %v2140 = vpop.f32.mrb[0].mxu0
    %v2141 = vadd.f32 %v1779, %v2140
    %v2142 = vpop.f32.mrb[0].mxu0
    %v2143 = vadd.f32 %v1783, %v2142
    %v2144 = vpop.f32.mrb[0].mxu0
    %v2145 = vadd.f32 %v1779, %v2144
    %v2146 = vpop.f32.mrb[0].mxu0
    %v2147 = vadd.f32 %v1783, %v2146
    %2148 = vdwg.mxu0
    %2149 = vmatprep.subr.bf16.mxu0 %v2011
    %2150 = vmatpush1.bf16.msra.mxu0 %v2010
    %2151 = vmatprep.subr.bf16.mxu0 %v2013
    %2152 = vmatpush1.bf16.msra.mxu0 %v2012
    %2153 = vmatprep.subr.bf16.mxu0 %v2015
    %2154 = vmatpush1.bf16.msra.mxu0 %v2014
    %2155 = vmatprep.subr.bf16.mxu0 %v2017
    %2156 = vmatpush1.bf16.msra.mxu0 %v2016
    %2157 = vmatprep.subr.bf16.mxu0 %v2019
    %2158 = vmatpush1.bf16.msra.mxu0 %v2018
    %2159 = vmatprep.subr.bf16.mxu0 %v2021
    %2160 = vmatpush1.bf16.msra.mxu0 %v2020
    %2161 = vmatprep.subr.bf16.mxu0 %v2023
    %2162 = vmatpush1.bf16.msra.mxu0 %v2022
    %2163 = vmatprep.subr.bf16.mxu0 %v2025
    %2164 = vmatpush1.bf16.msra.mxu0 %v2024
    %2165 = vmatprep.subr.bf16.mxu0 %v2027
    %2166 = vmatpush1.bf16.msra.mxu0 %v2026
    %2167 = vmatprep.subr.bf16.mxu0 %v2029
    %2168 = vmatpush1.bf16.msra.mxu0 %v2028
    %2169 = vmatprep.subr.bf16.mxu0 %v2031
    %2170 = vmatpush1.bf16.msra.mxu0 %v2030
    %2171 = vmatprep.subr.bf16.mxu0 %v2033
    %2172 = vmatpush1.bf16.msra.mxu0 %v2032
    %2173 = vmatprep.subr.bf16.mxu0 %v2035
    %2174 = vmatpush1.bf16.msra.mxu0 %v2034
    %2175 = vmatprep.subr.bf16.mxu0 %v2037
    %2176 = vmatpush1.bf16.msra.mxu0 %v2036
    %2177 = vmatprep.subr.bf16.mxu0 %v2039
    %2178 = vmatpush1.bf16.msra.mxu0 %v2038
    %2179 = vmatprep.subr.bf16.mxu0 %v2041
    %2180 = vmatpush1.bf16.msra.mxu0 %v2040
    %2181 = vmatprep.mubr.bf16.mxu0 %v1709
    %2182 = vmatmul.mubr.bf16.gmra.mrb[0].mxu0 %v1708
    %v2183 = vpop.f32.mrb[0].mxu0
    %v2184 = vadd.f32 %v2141, %v2183
    %v2185 = vpop.f32.mrb[0].mxu0
    %v2186 = vadd.f32 %v2143, %v2185
    %v2187 = vpop.f32.mrb[0].mxu0
    %v2188 = vadd.f32 %v2145, %v2187
    %v2189 = vpop.f32.mrb[0].mxu0
    %v2190 = vadd.f32 %v2147, %v2189
    %2191 = vdwg.mxu0
    %vm2192 = vcmp.gt.f32.partialorder %v2184, 0.0
    %vm2193 = vcmp.gt.f32.partialorder %v2186, 0.0
    %vm2194 = vcmp.gt.f32.partialorder %v2188, 0.0
    %vm2195 = vcmp.gt.f32.partialorder %v2190, 0.0
    %v2196 = vmul.f32 %v2184, 0.2
    %v2197 = vmul.f32 %v2186, 0.2
    %v2198 = vmul.f32 %v2188, 0.2
    %v2199 = vmul.f32 %v2190, 0.2
    %v2200 = vsel %vm2192, %v2184, %v2196
    %v2201 = vsel %vm2193, %v2186, %v2197
    %v2202 = vsel %vm2194, %v2188, %v2198
    %v2203 = vsel %vm2195, %v2190, %v2199
    %v2204 = vpack.c.bf16 %v2202, %v2200
    %v2205 = vpack.c.bf16 %v2203, %v2201
    %v2206 = vld [vmem:[%s5] sm:$0xff]
    %v2207 = vld [vmem:[%s6] sm:$0xff]
    %2209 = vset.pattern.permute.xlu0 0
    %2210 = vperm.xlu0 %2209, %v2207
    %v2211 = vpop.permute.xlu0 %2210
    %v2214 = vunpack.c.l.b16 %v2206
    %v2215 = vunpack.c.h.b16 %v2206
    %v2216 = vpack.c.b16 %v2214, %v2214
    %v2217 = vpack.c.b16 %v2215, %v2215
    %2220 = vmatprep.subr.bf16.mxu0 %v2205
    %2221 = vmatpush1.bf16.xpose.msra.mxu0 %v2204
    %2222 = vmatprep.subr.bf16.mxu0 0
    %2223 = vmatpush1.bf16.xpose.msra.mxu0 0
    %2224 = vmatprep.subr.bf16.mxu0 0
    %2225 = vmatpush1.bf16.xpose.msra.mxu0 0
    %2226 = vmatprep.subr.bf16.mxu0 0
    %2227 = vmatpush1.bf16.xpose.msra.mxu0 0
    %2228 = vmatprep.subr.bf16.mxu0 0
    %2229 = vmatpush1.bf16.xpose.msra.mxu0 0
    %2230 = vmatprep.subr.bf16.mxu0 0
    %2231 = vmatpush1.bf16.xpose.msra.mxu0 0
    %2232 = vmatprep.subr.bf16.mxu0 0
    %2233 = vmatpush1.bf16.xpose.msra.mxu0 0
    %2234 = vmatprep.subr.bf16.mxu0 0
    %2235 = vmatpush1.bf16.xpose.msra.mxu0 0
    %2236 = vmatprep.subr.bf16.mxu0 0
    %2237 = vmatpush1.bf16.xpose.msra.mxu0 0
    %2238 = vmatprep.subr.bf16.mxu0 0
    %2239 = vmatpush1.bf16.xpose.msra.mxu0 0
    %2240 = vmatprep.subr.bf16.mxu0 0
    %2241 = vmatpush1.bf16.xpose.msra.mxu0 0
    %2242 = vmatprep.subr.bf16.mxu0 0
    %2243 = vmatpush1.bf16.xpose.msra.mxu0 0
    %2244 = vmatprep.subr.bf16.mxu0 0
    %2245 = vmatpush1.bf16.xpose.msra.mxu0 0
    %2246 = vmatprep.subr.bf16.mxu0 0
    %2247 = vmatpush1.bf16.xpose.msra.mxu0 0
    %2248 = vmatprep.subr.bf16.mxu0 0
    %2249 = vmatpush1.bf16.xpose.msra.mxu0 0
    %2250 = vmatprep.subr.bf16.mxu0 0
    %2251 = vmatpush1.bf16.xpose.msra.mxu0 0
    %2252 = vmatprep.mubr.bf16.mxu0 %v2217
    %2253 = vmatmul.mubr.bf16.gmra.mrb[0].mxu0 %v2216
    %v2254 = vpop.f32.mrb[0].mxu0
    %v2255 = vadd.f32 %v2211, %v2254
    %v2256 = vpop.f32.mrb[0].mxu0
    %v2257 = vpop.f32.mrb[0].mxu0
    %v2258 = vpop.f32.mrb[0].mxu0
    %2259 = vdwg.mxu0
    %2260 = vst.msk [vmem:[#allocation8] sm:$0xff] %vm1334, %v2255
    // Predicated region
    $region42: #{tpu_custom_call.1} parent=1 // pred_check
      _
    $region43: #{tpu_custom_call.1} parent=1 // pred_check_branch
      %2262 = sbr.rel (0) target = $region45
    $region44: #{tpu_custom_call.1} parent=1 // pred_region
      %s2264 = ssub.s32 128, 128
      %2265 = vsyncadd [#allocation4], %s2264
      %s2267 = sshll.u32 [#allocation8], 4
      %s2268 = int_to_ptr.vmem [resolvable:$true] %s2267
      %2270 = dma.vmem_to_hbm [thread:$0]  %s2268, 128, %s7, [#allocation4]
    $region45: #{tpu_custom_call.1} parent=1 // pred_fallthru
      _
    // Predicated region
    $region46: #{tpu_custom_call.1} parent=1 // pred_check
      _
    $region47: #{tpu_custom_call.1} parent=1 // pred_check_branch
      %2272 = sbr.rel (0) target = $region49
    $region48: #{tpu_custom_call.1} parent=1 // pred_region
      %2273 = dma.done [#allocation4], 128
    $region49: #{tpu_custom_call.1} parent=1 // pred_fallthru
      _
    %2274 = vsyncpa [#allocation3], 1
    %2275 = vsyncpa [#allocation6], 1
    %2276 = vsyncpa [#allocation4], 1

</llo_original>
